<compile_context>
chip_gen: v5e
topology: v5e:2x2
jax: 0.10.0
libtpu: 0.0.40
codegen_flags: <defaults>
</compile_context>

<pallas_src>
import functools

import jax
import jax.numpy as jnp
from jax.experimental import pallas as pl
from jax.experimental.pallas import tpu as pltpu

NUM_GGC_STEPS = 2          # GatedGraphConv(num_layers=2) inside every ResGraphModule
BN_EPS = 1e-5
LANE = 128
SUBLANE = 8


def _round_up(x, m):
    return ((x + m - 1) // m) * m


def _pad_to(a, shape):
    pads = [(0, t - s) for s, t in zip(a.shape, shape)]
    return jnp.pad(a, pads)


def _full_spec(shape):
    nd = len(shape)
    return pl.BlockSpec(shape, lambda l, nd=nd: (0,) * nd)


def _layer_spec(shape):
    nd = len(shape)
    block = (1,) + tuple(shape[1:])
    return pl.BlockSpec(block, lambda l, nd=nd: (l,) + (0,) * (nd - 1))


# ----------------------------------------------------------------------------
# Fused kernel: prologue (embeddings) -> n_layers x ResGraphModule -> pool+head
# ----------------------------------------------------------------------------
def _fused_kernel(x_ref, eattr_ref, src_oh_ref, dst_oh_t_ref, inv_deg_ref,
                  batch_oh_t_ref, inv_cnt_ref, vert_w_ref, edge_w_ref,
                  bn_scale_ref, bn_shift_ref, edge_lin_ref, ggc_w_ref,
                  gru_wi_ref, gru_wh_ref, gru_b_ref,
                  head_w1_ref, head_b1_ref, head_w2_ref, head_b2_ref,
                  out_ref,
                  h_scr, eat0_scr):
    C_pad = h_scr.shape[1]                   # padded channel width (128)
    Cg = gru_b_ref.shape[-1] // 4            # true hidden width (gate stride, 32)
    layer = pl.program_id(0)

    # ---- prologue: vert_emb / edge_emb (Linear, no bias), bf16 x bf16 -> f32 ----
    @pl.when(layer == 0)
    def _prologue():
        h_scr[...] = jnp.dot(x_ref[...], vert_w_ref[...],
                             preferred_element_type=jnp.float32)
        eat0_scr[...] = jnp.dot(eattr_ref[...], edge_w_ref[...],
                                preferred_element_type=jnp.float32
                                ).astype(jnp.bfloat16)

    src_oh = src_oh_ref[...]                 # (E, N) bf16 one-hot of edge source
    dst_oh_t = dst_oh_t_ref[...]             # (N, E) bf16 one-hot^T of edge target
    inv_deg = inv_deg_ref[...]               # (N, 1) precomputed 1/max(in_deg,1)

    # ---- ResGraphModule body ----------------------------------------------
    # BatchNorm1d (eval mode), folded to scale/shift on the host.
    # TODO(synk): training-mode BN (batch statistics) not reproduced here.
    xb = h_scr[...] * bn_scale_ref[0] + bn_shift_ref[0]

    # edge_lin (Linear, no bias), per layer: (E, hidden) @ (hidden, C)   [bf16 x bf16]
    eat = jnp.dot(eat0_scr[...], edge_lin_ref[0], preferred_element_type=jnp.float32)

    zero_pad = (jnp.zeros((xb.shape[0], C_pad - Cg), jnp.float32)
                if C_pad > Cg else None)

    h = xb
    for step in range(NUM_GGC_STEPS):
        m = jnp.dot(h.astype(jnp.bfloat16), ggc_w_ref[0, step],
                    preferred_element_type=jnp.float32)
        # gather source-node messages (one-hot matmul, bf16 operands, f32 acc)
        m_j = jnp.dot(src_oh, m.astype(jnp.bfloat16),
                      preferred_element_type=jnp.float32)
        msg = jnp.maximum(m_j + eat, 0.0)                      # message(): relu
        # mean aggregation onto target nodes
        agg = jnp.dot(dst_oh_t, msg.astype(jnp.bfloat16),
                      preferred_element_type=jnp.float32) * inv_deg

        # GRUCell(input=agg, hidden=h): two compact bf16 MXU pushes, gate
        # columns at the true hidden stride  [ r | z | i_n | h_n ], each Cg wide.
        gates = (jnp.dot(agg.astype(jnp.bfloat16), gru_wi_ref[0],
                         preferred_element_type=jnp.float32)
                 + jnp.dot(h.astype(jnp.bfloat16), gru_wh_ref[0],
                           preferred_element_type=jnp.float32)
                 + gru_b_ref[0])
        r = jax.nn.sigmoid(gates[:, 0:Cg])
        z = jax.nn.sigmoid(gates[:, Cg:2 * Cg])
        n = jnp.tanh(gates[:, 2 * Cg:3 * Cg] + r * gates[:, 3 * Cg:4 * Cg])
        h_core = (1.0 - z) * n + z * h[:, 0:Cg]
        # restore padded lane width (padded lanes stay structurally zero)
        h = (jnp.concatenate([h_core, zero_pad], axis=1)
             if zero_pad is not None else h_core)

    h = jnp.maximum(h, 0.0)                                     # ReLU
    # residual=True, alpha=0.5, res_lin = Identity (mix against post-BN x_)
    h_new = 0.5 * h + 0.5 * xb
    h_scr[...] = h_new

    # ---- epilogue: global_mean_pool + head (Linear -> GELU -> Linear) ------
    @pl.when(layer == pl.num_programs(0) - 1)
    def _epilogue():
        pooled = jnp.dot(batch_oh_t_ref[...], h_new.astype(jnp.bfloat16),
                         preferred_element_type=jnp.float32) * inv_cnt_ref[...]
        hid = jnp.dot(pooled.astype(jnp.bfloat16), head_w1_ref[...],
                      preferred_element_type=jnp.float32) + head_b1_ref[...]
        # exact (erf-based) GELU, matching torch.nn.GELU() default
        hid = 0.5 * hid * (1.0 + jax.lax.erf(hid * 0.7071067811865476))
        # TODO(synk): Dropout(p=0.5) in the head is eval-mode identity here (no RNG).
        out_ref[...] = jnp.dot(hid.astype(jnp.bfloat16), head_w2_ref[...],
                               preferred_element_type=jnp.float32) + head_b2_ref[...]


# ----------------------------------------------------------------------------
# Parameter init (deterministic, synthetic) and packing to padded/stacked form
# ----------------------------------------------------------------------------
def init_params(key, hidden, n_layers, n_ff, n_ydim):
    def nxt():
        nonlocal key
        key, sub = jax.random.split(key)
        return sub

    def u(shape, s=0.2):
        return jax.random.uniform(nxt(), shape, jnp.float32, -s, s)

    C = hidden  # grow_size=1.0 -> every layer width == hidden
    params = {
        "vert_emb": u((13, hidden)),      # Linear(13, hidden, bias=False), pre-transposed
        "edge_emb": u((4, hidden)),       # Linear(4, hidden, bias=False), pre-transposed
        "layers": [],
        "head_w1": u((C, n_ff)),
        "head_b1": u((1, n_ff)),
        "head_w2": u((n_ff, n_ydim)),
        "head_b2": u((1, n_ydim)),
    }
    for _ in range(n_layers):
        params["layers"].append(dict(
            bn_gamma=1.0 + u((1, C)),
            bn_beta=u((1, C)),
            bn_mean=u((1, C)),
            bn_var=1.0 + jnp.abs(u((1, C))),
            edge_lin=u((hidden, C)),       # Linear(hidden, in_channels, bias=False), pre-T
            ggc_w=u((NUM_GGC_STEPS, C, C)),
            gru_wih=u((C, 3 * C)),         # GRUCell weight_ih^T, gate order [r|z|n]
            gru_whh=u((C, 3 * C)),         # GRUCell weight_hh^T
            gru_bih=u((1, 3 * C)),
            gru_bhh=u((1, 3 * C)),
        ))
    return params


def pack_params(params):
    C = params["layers"][0]["bn_gamma"].shape[1]
    C_pad = _round_up(C, LANE)
    F_pad = _round_up(params["vert_emb"].shape[0], LANE)
    Fe_pad = _round_up(params["edge_emb"].shape[0], LANE)
    FF_pad = _round_up(params["head_w1"].shape[1], LANE)
    Y_pad = _round_up(params["head_w2"].shape[1], LANE)
    bf16 = jnp.bfloat16

    packed = {
        "vert_w": _pad_to(params["vert_emb"], (F_pad, C_pad)).astype(bf16),
        "edge_w": _pad_to(params["edge_emb"], (Fe_pad, C_pad)).astype(bf16),
        "head_w1": _pad_to(params["head_w1"], (C_pad, FF_pad)).astype(bf16),
        "head_b1": _pad_to(params["head_b1"], (1, FF_pad)),
        "head_w2": _pad_to(params["head_w2"], (FF_pad, Y_pad)).astype(bf16),
        "head_b2": _pad_to(params["head_b2"], (1, Y_pad)),
    }

    bn_scale, bn_shift, edge_lin, ggc_w = [], [], [], []
    gru_wi, gru_wh, gru_b = [], [], []
    zero_cc = jnp.zeros((C, C), jnp.float32)
    for lp in params["layers"]:
        # fold BatchNorm (eval) into scale/shift (kept f32)
        scale = lp["bn_gamma"] * jax.lax.rsqrt(lp["bn_var"] + BN_EPS)
        shift = lp["bn_beta"] - lp["bn_mean"] * scale
        bn_scale.append(_pad_to(scale, (1, C_pad)))
        bn_shift.append(_pad_to(shift, (1, C_pad)))
        edge_lin.append(_pad_to(lp["edge_lin"], (C_pad, C_pad)).astype(bf16))
        ggc_w.append(_pad_to(lp["ggc_w"], (NUM_GGC_STEPS, C_pad, C_pad)).astype(bf16))

        wih, whh = lp["gru_wih"], lp["gru_whh"]     # (C, 3C), torch gate order [r|z|n]
        bih, bhh = lp["gru_bih"], lp["gru_bhh"]     # (1, 3C)

        # compact gate layout (stride C): [ r | z | i_n | h_n ]
        wi = jnp.concatenate([wih[:, 0:C], wih[:, C:2 * C], wih[:, 2 * C:3 * C],
                              zero_cc], axis=1)                       # (C, 4C)
        wh = jnp.concatenate([whh[:, 0:C], whh[:, C:2 * C], zero_cc,
                              whh[:, 2 * C:3 * C]], axis=1)           # (C, 4C)
        gru_wi.append(_pad_to(wi, (C_pad, 4 * C)).astype(bf16))        # zero rows beyond C
        gru_wh.append(_pad_to(wh, (C_pad, 4 * C)).astype(bf16))
        gru_b.append(jnp.concatenate(
            [bih[:, 0:C] + bhh[:, 0:C], bih[:, C:2 * C] + bhh[:, C:2 * C],
             bih[:, 2 * C:3 * C], bhh[:, 2 * C:3 * C]], axis=1))       # (1, 4C) f32

    packed["bn_scale"] = jnp.stack(bn_scale)
    packed["bn_shift"] = jnp.stack(bn_shift)
    packed["edge_lin"] = jnp.stack(edge_lin)
    packed["ggc_w"] = jnp.stack(ggc_w)
    packed["gru_wi"] = jnp.stack(gru_wi)
    packed["gru_wh"] = jnp.stack(gru_wh)
    packed["gru_b"] = jnp.stack(gru_b)
    return packed


# ----------------------------------------------------------------------------
# Full forward
# ----------------------------------------------------------------------------
def gated_gcn_forward(packed, x, edge_index, edge_attr, batch,
                      *, n_layers, num_graphs, n_ydim):
    N = x.shape[0]
    E = edge_attr.shape[0]
    N_pad = _round_up(N, SUBLANE)
    E_pad = _round_up(E, SUBLANE)
    B_pad = _round_up(num_graphs, SUBLANE)
    F_pad = packed["vert_w"].shape[0]
    Fe_pad = packed["edge_w"].shape[0]
    C_pad = packed["vert_w"].shape[1]
    FF_pad = packed["head_w1"].shape[1]
    Y_pad = packed["head_w2"].shape[1]
    Cg = packed["gru_b"].shape[-1] // 4

    # host-side graph prep (hoisted out of the kernel)
    # TODO(synk): replace dense one-hots with scalar-prefetch indexed gather for big graphs.
    src_oh = jax.nn.one_hot(edge_index[0], N_pad, dtype=jnp.float32)     # (E, N_pad)
    dst_oh = jax.nn.one_hot(edge_index[1], N_pad, dtype=jnp.float32)     # (E, N_pad)
    deg = jnp.sum(dst_oh, axis=0)                                        # in-degree
    inv_deg = (1.0 / jnp.maximum(deg, 1.0)).reshape(N_pad, 1)
    src_oh = _pad_to(src_oh, (E_pad, N_pad)).astype(jnp.bfloat16)
    dst_oh_t = _pad_to(dst_oh.T, (N_pad, E_pad)).astype(jnp.bfloat16)

    batch_oh = jax.nn.one_hot(batch, B_pad, dtype=jnp.float32)           # (N, B_pad)
    cnt = jnp.sum(batch_oh, axis=0)
    inv_cnt = (1.0 / jnp.maximum(cnt, 1.0)).reshape(B_pad, 1)
    batch_oh_t = _pad_to(batch_oh.T, (B_pad, N_pad)).astype(jnp.bfloat16)

    x_pad = _pad_to(x.astype(jnp.float32), (N_pad, F_pad)).astype(jnp.bfloat16)
    eattr_pad = _pad_to(edge_attr.astype(jnp.float32), (E_pad, Fe_pad)).astype(jnp.bfloat16)

    args = (x_pad, eattr_pad, src_oh, dst_oh_t, inv_deg, batch_oh_t, inv_cnt,
            packed["vert_w"], packed["edge_w"],
            packed["bn_scale"], packed["bn_shift"], packed["edge_lin"],
            packed["ggc_w"], packed["gru_wi"], packed["gru_wh"], packed["gru_b"],
            packed["head_w1"], packed["head_b1"], packed["head_w2"], packed["head_b2"])

    in_specs = [
        _full_spec(x_pad.shape), _full_spec(eattr_pad.shape),
        _full_spec(src_oh.shape), _full_spec(dst_oh_t.shape),
        _full_spec(inv_deg.shape), _full_spec(batch_oh_t.shape), _full_spec(inv_cnt.shape),
        _full_spec(packed["vert_w"].shape), _full_spec(packed["edge_w"].shape),
        _layer_spec(packed["bn_scale"].shape), _layer_spec(packed["bn_shift"].shape),
        _layer_spec(packed["edge_lin"].shape), _layer_spec(packed["ggc_w"].shape),
        _layer_spec(packed["gru_wi"].shape), _layer_spec(packed["gru_wh"].shape),
        _layer_spec(packed["gru_b"].shape),
        _full_spec(packed["head_w1"].shape), _full_spec(packed["head_b1"].shape),
        _full_spec(packed["head_w2"].shape), _full_spec(packed["head_b2"].shape),
    ]

    # rough cost estimate (helps XLA schedule the fused custom call)
    per_step = (2 * N_pad * C_pad * C_pad + 2 * E_pad * N_pad * C_pad
                + 2 * N_pad * E_pad * C_pad + 2 * 2 * N_pad * C_pad * (4 * Cg))
    per_layer = 2 * E_pad * C_pad * C_pad + NUM_GGC_STEPS * per_step + 12 * N_pad * C_pad
    flops = (2 * N_pad * F_pad * C_pad + 2 * E_pad * Fe_pad * C_pad
             + n_layers * per_layer
             + 2 * B_pad * N_pad * C_pad + 2 * B_pad * C_pad * FF_pad
             + 2 * B_pad * FF_pad * Y_pad)
    transcendentals = n_layers * NUM_GGC_STEPS * N_pad * 3 * Cg + B_pad * FF_pad
    bytes_accessed = sum(int(a.size) * a.dtype.itemsize for a in args) + B_pad * Y_pad * 4

    out_pad = pl.pallas_call(
        _fused_kernel,
        out_shape=jax.ShapeDtypeStruct((B_pad, Y_pad), jnp.float32),
        grid=(n_layers,),
        in_specs=in_specs,
        out_specs=pl.BlockSpec((B_pad, Y_pad), lambda l: (0, 0)),
        scratch_shapes=[pltpu.VMEM((N_pad, C_pad), jnp.float32),     # node features h
                        pltpu.VMEM((E_pad, C_pad), jnp.bfloat16)],   # embedded edge feats
        compiler_params=pltpu.CompilerParams(
            dimension_semantics=("arbitrary",),
            # NOTE: re-derive per generation when scaling graphs (<=~48MiB on v7x).
            vmem_limit_bytes=32 * 1024 * 1024),
        cost_estimate=pl.CostEstimate(flops=flops,
                                      transcendentals=transcendentals,
                                      bytes_accessed=bytes_accessed),
    )(*args)

    return out_pad[:num_graphs, :n_ydim]


if __name__ == "__main__":
    hidden = 32
    n_layers = 3        # GatedGCN(..., grow_size=1.0, n_layers=3)
    n_ff = 64
    n_ydim = 1
    N, E, B = 16, 40, 2

    key = jax.random.PRNGKey(0)
    k1, k2, k3, kp = jax.random.split(key, 4)
    x = jax.random.normal(k1, (N, 13), jnp.float32)
    edge_attr = jax.random.normal(k2, (E, 4), jnp.float32)
    edge_index = jax.random.randint(k3, (2, E), 0, N, jnp.int32)
    batch = jnp.concatenate([jnp.zeros(N // 2, jnp.int32),
                             jnp.ones(N - N // 2, jnp.int32)])

    params = init_params(kp, hidden, n_layers, n_ff, n_ydim)
    packed = pack_params(params)

    fwd = jax.jit(functools.partial(gated_gcn_forward,
                                    n_layers=n_layers, num_graphs=B, n_ydim=n_ydim))
    out = fwd(packed, x, edge_index, edge_attr, batch)
    out = jax.block_until_ready(out)
    assert out.shape == (B, n_ydim), out.shape
    assert bool(jnp.all(jnp.isfinite(out)))
    print("KERNEL_OK")
</pallas_src>

<mosaic_0001>
module attributes {stable_mosaic.version = 11 : i64} {
  func.func @_fused_kernel(%arg0: i32, %arg1: memref<16x128xbf16, #tpu.memory_space<vmem>>, %arg2: memref<40x128xbf16, #tpu.memory_space<vmem>>, %arg3: memref<40x16xbf16, #tpu.memory_space<vmem>>, %arg4: memref<16x40xbf16, #tpu.memory_space<vmem>>, %arg5: memref<16x1xf32, #tpu.memory_space<vmem>>, %arg6: memref<8x16xbf16, #tpu.memory_space<vmem>>, %arg7: memref<8x1xf32, #tpu.memory_space<vmem>>, %arg8: memref<128x128xbf16, #tpu.memory_space<vmem>>, %arg9: memref<128x128xbf16, #tpu.memory_space<vmem>>, %arg10: memref<1x1x128xf32, #tpu.memory_space<vmem>>, %arg11: memref<1x1x128xf32, #tpu.memory_space<vmem>>, %arg12: memref<1x128x128xbf16, #tpu.memory_space<vmem>>, %arg13: memref<1x2x128x128xbf16, #tpu.memory_space<vmem>>, %arg14: memref<1x128x128xbf16, #tpu.memory_space<vmem>>, %arg15: memref<1x128x128xbf16, #tpu.memory_space<vmem>>, %arg16: memref<1x1x128xf32, #tpu.memory_space<vmem>>, %arg17: memref<128x128xbf16, #tpu.memory_space<vmem>>, %arg18: memref<1x128xf32, #tpu.memory_space<vmem>>, %arg19: memref<128x128xbf16, #tpu.memory_space<vmem>>, %arg20: memref<1x128xf32, #tpu.memory_space<vmem>>, %arg21: memref<8x128xf32, #tpu.memory_space<vmem>>, %arg22: memref<16x128xf32, #tpu.memory_space<vmem>>, %arg23: memref<40x128xbf16, #tpu.memory_space<vmem>>) attributes {dimension_semantics = [#tpu.dimension_semantics<arbitrary>], iteration_bounds = array<i64: 3>, scalar_prefetch = 0 : i64, scratch_operands = 2 : i64, tpu.core_type = #tpu.core_type<tc>, window_params = [{pipeline_mode = #tpu.pipeline_mode<synchronous>, transform_indices = @transform_0, window_bounds = array<i64: 16, 128>}, {pipeline_mode = #tpu.pipeline_mode<synchronous>, transform_indices = @transform_1, window_bounds = array<i64: 40, 128>}, {pipeline_mode = #tpu.pipeline_mode<synchronous>, transform_indices = @transform_2, window_bounds = array<i64: 40, 16>}, {pipeline_mode = #tpu.pipeline_mode<synchronous>, transform_indices = @transform_3, window_bounds = array<i64: 16, 40>}, {pipeline_mode = #tpu.pipeline_mode<synchronous>, transform_indices = @transform_4, window_bounds = array<i64: 16, 1>}, {pipeline_mode = #tpu.pipeline_mode<synchronous>, transform_indices = @transform_5, window_bounds = array<i64: 8, 16>}, {pipeline_mode = #tpu.pipeline_mode<synchronous>, transform_indices = @transform_6, window_bounds = array<i64: 8, 1>}, {pipeline_mode = #tpu.pipeline_mode<synchronous>, transform_indices = @transform_7, window_bounds = array<i64: 128, 128>}, {pipeline_mode = #tpu.pipeline_mode<synchronous>, transform_indices = @transform_8, window_bounds = array<i64: 128, 128>}, {transform_indices = @transform_9, window_bounds = array<i64: 1, 1, 128>}, {transform_indices = @transform_10, window_bounds = array<i64: 1, 1, 128>}, {transform_indices = @transform_11, window_bounds = array<i64: 1, 128, 128>}, {transform_indices = @transform_12, window_bounds = array<i64: 1, 2, 128, 128>}, {transform_indices = @transform_13, window_bounds = array<i64: 1, 128, 128>}, {transform_indices = @transform_14, window_bounds = array<i64: 1, 128, 128>}, {transform_indices = @transform_15, window_bounds = array<i64: 1, 1, 128>}, {pipeline_mode = #tpu.pipeline_mode<synchronous>, transform_indices = @transform_16, window_bounds = array<i64: 128, 128>}, {pipeline_mode = #tpu.pipeline_mode<synchronous>, transform_indices = @transform_17, window_bounds = array<i64: 1, 128>}, {pipeline_mode = #tpu.pipeline_mode<synchronous>, transform_indices = @transform_18, window_bounds = array<i64: 128, 128>}, {pipeline_mode = #tpu.pipeline_mode<synchronous>, transform_indices = @transform_19, window_bounds = array<i64: 1, 128>}, {pipeline_mode = #tpu.pipeline_mode<synchronous>, transform_indices = @transform_20, window_bounds = array<i64: 8, 128>}]} {
    %c0_i32 = arith.constant 0 : i32
    %0 = arith.cmpi eq, %arg0, %c0_i32 : i32
    %1 = arith.extui %0 : i1 to i32
    %c0_i32_0 = arith.constant 0 : i32
    %2 = arith.cmpi ne, %1, %c0_i32_0 : i32
    scf.if %2 {
      %c0_69 = arith.constant 0 : index
      %c0_70 = arith.constant 0 : index
      %131 = vector.load %arg1[%c0_69, %c0_70] : memref<16x128xbf16, #tpu.memory_space<vmem>>, vector<16x128xbf16>
      %c0_71 = arith.constant 0 : index
      %c0_72 = arith.constant 0 : index
      %132 = vector.load %arg8[%c0_71, %c0_72] : memref<128x128xbf16, #tpu.memory_space<vmem>>, vector<128x128xbf16>
      %cst_73 = arith.constant dense<0.000000e+00> : vector<16x128xf32>
      %133 = tpu.matmul %131, %132, %cst_73 {dimension_numbers = #tpu.dot_dimension_numbers<[1], [0], [0], [1], [0, 0, 1, 1], [], []>} : vector<16x128xbf16>, vector<128x128xbf16>, vector<16x128xf32> -> vector<16x128xf32>
      %c0_74 = arith.constant 0 : index
      %c0_75 = arith.constant 0 : index
      %134 = vector.load %arg22[%c0_74, %c0_75] : memref<16x128xf32, #tpu.memory_space<vmem>>, vector<16x128xf32>
      tpu.vector_store %arg22[%c0_74, %c0_75], %133 {strides = array<i32>} : memref<16x128xf32, #tpu.memory_space<vmem>>, vector<16x128xf32>,
      %c0_76 = arith.constant 0 : index
      %c0_77 = arith.constant 0 : index
      %135 = vector.load %arg2[%c0_76, %c0_77] : memref<40x128xbf16, #tpu.memory_space<vmem>>, vector<40x128xbf16>
      %c0_78 = arith.constant 0 : index
      %c0_79 = arith.constant 0 : index
      %136 = vector.load %arg9[%c0_78, %c0_79] : memref<128x128xbf16, #tpu.memory_space<vmem>>, vector<128x128xbf16>
      %cst_80 = arith.constant dense<0.000000e+00> : vector<40x128xf32>
      %137 = tpu.matmul %135, %136, %cst_80 {dimension_numbers = #tpu.dot_dimension_numbers<[1], [0], [0], [1], [0, 0, 1, 1], [], []>} : vector<40x128xbf16>, vector<128x128xbf16>, vector<40x128xf32> -> vector<40x128xf32>
      %138 = arith.truncf %137 : vector<40x128xf32> to vector<40x128xbf16>
      %c0_81 = arith.constant 0 : index
      %c0_82 = arith.constant 0 : index
      %139 = vector.load %arg23[%c0_81, %c0_82] : memref<40x128xbf16, #tpu.memory_space<vmem>>, vector<40x128xbf16>
      tpu.vector_store %arg23[%c0_81, %c0_82], %138 {strides = array<i32>} : memref<40x128xbf16, #tpu.memory_space<vmem>>, vector<40x128xbf16>,
    } else {
    }
    %c0 = arith.constant 0 : index
    %c0_1 = arith.constant 0 : index
    %3 = vector.load %arg3[%c0, %c0_1] : memref<40x16xbf16, #tpu.memory_space<vmem>>, vector<40x16xbf16>
    %c0_2 = arith.constant 0 : index
    %c0_3 = arith.constant 0 : index
    %4 = vector.load %arg4[%c0_2, %c0_3] : memref<16x40xbf16, #tpu.memory_space<vmem>>, vector<16x40xbf16>
    %c0_4 = arith.constant 0 : index
    %c0_5 = arith.constant 0 : index
    %5 = vector.load %arg5[%c0_4, %c0_5] : memref<16x1xf32, #tpu.memory_space<vmem>>, vector<16x1xf32>
    %c0_6 = arith.constant 0 : index
    %c0_7 = arith.constant 0 : index
    %6 = vector.load %arg22[%c0_6, %c0_7] : memref<16x128xf32, #tpu.memory_space<vmem>>, vector<16x128xf32>
    %c0_8 = arith.constant 0 : index
    %c0_9 = arith.constant 0 : index
    %c0_10 = arith.constant 0 : index
    %7 = vector.load %arg10[%c0_8, %c0_9, %c0_10] : memref<1x1x128xf32, #tpu.memory_space<vmem>>, vector<1x1x128xf32>
    %8 = vector.shape_cast %7 : vector<1x1x128xf32> to vector<1x128xf32>
    %9 = vector.broadcast %8 : vector<1x128xf32> to vector<16x128xf32>
    %10 = arith.mulf %6, %9 : vector<16x128xf32>
    %c0_11 = arith.constant 0 : index
    %c0_12 = arith.constant 0 : index
    %c0_13 = arith.constant 0 : index
    %11 = vector.load %arg11[%c0_11, %c0_12, %c0_13] : memref<1x1x128xf32, #tpu.memory_space<vmem>>, vector<1x1x128xf32>
    %12 = vector.shape_cast %11 : vector<1x1x128xf32> to vector<1x128xf32>
    %13 = vector.broadcast %12 : vector<1x128xf32> to vector<16x128xf32>
    %14 = arith.addf %10, %13 : vector<16x128xf32>
    %c0_14 = arith.constant 0 : index
    %c0_15 = arith.constant 0 : index
    %15 = vector.load %arg23[%c0_14, %c0_15] : memref<40x128xbf16, #tpu.memory_space<vmem>>, vector<40x128xbf16>
    %c0_16 = arith.constant 0 : index
    %c0_17 = arith.constant 0 : index
    %c0_18 = arith.constant 0 : index
    %16 = vector.load %arg12[%c0_16, %c0_17, %c0_18] : memref<1x128x128xbf16, #tpu.memory_space<vmem>>, vector<1x128x128xbf16>
    %17 = vector.shape_cast %16 : vector<1x128x128xbf16> to vector<128x128xbf16>
    %cst = arith.constant dense<0.000000e+00> : vector<40x128xf32>
    %18 = tpu.matmul %15, %17, %cst {dimension_numbers = #tpu.dot_dimension_numbers<[1], [0], [0], [1], [0, 0, 1, 1], [], []>} : vector<40x128xbf16>, vector<128x128xbf16>, vector<40x128xf32> -> vector<40x128xf32>
    %cst_19 = arith.constant 0.000000e+00 : f32
    %19 = vector.broadcast %cst_19 : f32 to vector<16x96xf32>
    %20 = arith.truncf %14 : vector<16x128xf32> to vector<16x128xbf16>
    %c0_20 = arith.constant 0 : index
    %c0_21 = arith.constant 0 : index
    %c0_22 = arith.constant 0 : index
    %c0_23 = arith.constant 0 : index
    %21 = vector.load %arg13[%c0_20, %c0_21, %c0_22, %c0_23] : memref<1x2x128x128xbf16, #tpu.memory_space<vmem>>, vector<1x1x128x128xbf16>
    %22 = vector.shape_cast %21 : vector<1x1x128x128xbf16> to vector<128x128xbf16>
    %cst_24 = arith.constant dense<0.000000e+00> : vector<16x128xf32>
    %23 = tpu.matmul %20, %22, %cst_24 {dimension_numbers = #tpu.dot_dimension_numbers<[1], [0], [0], [1], [0, 0, 1, 1], [], []>} : vector<16x128xbf16>, vector<128x128xbf16>, vector<16x128xf32> -> vector<16x128xf32>
    %24 = arith.truncf %23 : vector<16x128xf32> to vector<16x128xbf16>
    %cst_25 = arith.constant dense<0.000000e+00> : vector<40x128xf32>
    %25 = tpu.matmul %3, %24, %cst_25 {dimension_numbers = #tpu.dot_dimension_numbers<[1], [0], [0], [1], [0, 0, 1, 1], [], []>} : vector<40x16xbf16>, vector<16x128xbf16>, vector<40x128xf32> -> vector<40x128xf32>
    %26 = arith.addf %25, %18 : vector<40x128xf32>
    %cst_26 = arith.constant 0.000000e+00 : f32
    %27 = vector.broadcast %cst_26 : f32 to vector<40x128xf32>
    %28 = arith.maximumf %26, %27 : vector<40x128xf32>
    %29 = arith.truncf %28 : vector<40x128xf32> to vector<40x128xbf16>
    %cst_27 = arith.constant dense<0.000000e+00> : vector<16x128xf32>
    %30 = tpu.matmul %4, %29, %cst_27 {dimension_numbers = #tpu.dot_dimension_numbers<[1], [0], [0], [1], [0, 0, 1, 1], [], []>} : vector<16x40xbf16>, vector<40x128xbf16>, vector<16x128xf32> -> vector<16x128xf32>
    %31 = vector.broadcast %5 : vector<16x1xf32> to vector<16x128xf32>
    %32 = arith.mulf %30, %31 : vector<16x128xf32>
    %33 = arith.truncf %32 : vector<16x128xf32> to vector<16x128xbf16>
    %c0_28 = arith.constant 0 : index
    %c0_29 = arith.constant 0 : index
    %c0_30 = arith.constant 0 : index
    %34 = vector.load %arg14[%c0_28, %c0_29, %c0_30] : memref<1x128x128xbf16, #tpu.memory_space<vmem>>, vector<1x128x128xbf16>
    %35 = vector.shape_cast %34 : vector<1x128x128xbf16> to vector<128x128xbf16>
    %cst_31 = arith.constant dense<0.000000e+00> : vector<16x128xf32>
    %36 = tpu.matmul %33, %35, %cst_31 {dimension_numbers = #tpu.dot_dimension_numbers<[1], [0], [0], [1], [0, 0, 1, 1], [], []>} : vector<16x128xbf16>, vector<128x128xbf16>, vector<16x128xf32> -> vector<16x128xf32>
    %37 = arith.truncf %14 : vector<16x128xf32> to vector<16x128xbf16>
    %c0_32 = arith.constant 0 : index
    %c0_33 = arith.constant 0 : index
    %c0_34 = arith.constant 0 : index
    %38 = vector.load %arg15[%c0_32, %c0_33, %c0_34] : memref<1x128x128xbf16, #tpu.memory_space<vmem>>, vector<1x128x128xbf16>
    %39 = vector.shape_cast %38 : vector<1x128x128xbf16> to vector<128x128xbf16>
    %cst_35 = arith.constant dense<0.000000e+00> : vector<16x128xf32>
    %40 = tpu.matmul %37, %39, %cst_35 {dimension_numbers = #tpu.dot_dimension_numbers<[1], [0], [0], [1], [0, 0, 1, 1], [], []>} : vector<16x128xbf16>, vector<128x128xbf16>, vector<16x128xf32> -> vector<16x128xf32>
    %41 = arith.addf %36, %40 : vector<16x128xf32>
    %c0_36 = arith.constant 0 : index
    %c0_37 = arith.constant 0 : index
    %c0_38 = arith.constant 0 : index
    %42 = vector.load %arg16[%c0_36, %c0_37, %c0_38] : memref<1x1x128xf32, #tpu.memory_space<vmem>>, vector<1x1x128xf32>
    %43 = vector.shape_cast %42 : vector<1x1x128xf32> to vector<1x128xf32>
    %44 = vector.broadcast %43 : vector<1x128xf32> to vector<16x128xf32>
    %45 = arith.addf %41, %44 : vector<16x128xf32>
    %46 = vector.extract_strided_slice %45 {offsets = [0, 0], sizes = [16, 32], strides = [1, 1]} : vector<16x128xf32> to vector<16x32xf32>
    %47 = arith.negf %46 : vector<16x32xf32>
    %48 = math.exp %47 : vector<16x32xf32>
    %cst_39 = arith.constant 1.000000e+00 : f32
    %49 = vector.broadcast %cst_39 : f32 to vector<16x32xf32>
    %50 = arith.addf %49, %48 : vector<16x32xf32>
    %51 = arith.divf %49, %50 : vector<16x32xf32>
    %52 = vector.extract_strided_slice %45 {offsets = [0, 32], sizes = [16, 32], strides = [1, 1]} : vector<16x128xf32> to vector<16x32xf32>
    %53 = arith.negf %52 : vector<16x32xf32>
    %54 = math.exp %53 : vector<16x32xf32>
    %cst_40 = arith.constant 1.000000e+00 : f32
    %55 = vector.broadcast %cst_40 : f32 to vector<16x32xf32>
    %56 = arith.addf %55, %54 : vector<16x32xf32>
    %57 = arith.divf %55, %56 : vector<16x32xf32>
    %58 = vector.extract_strided_slice %45 {offsets = [0, 64], sizes = [16, 32], strides = [1, 1]} : vector<16x128xf32> to vector<16x32xf32>
    %59 = vector.extract_strided_slice %45 {offsets = [0, 96], sizes = [16, 32], strides = [1, 1]} : vector<16x128xf32> to vector<16x32xf32>
    %60 = arith.mulf %51, %59 : vector<16x32xf32>
    %61 = arith.addf %58, %60 : vector<16x32xf32>
    %62 = math.tanh %61 : vector<16x32xf32>
    %cst_41 = arith.constant 1.000000e+00 : f32
    %63 = vector.broadcast %cst_41 : f32 to vector<16x32xf32>
    %64 = arith.subf %63, %57 : vector<16x32xf32>
    %65 = arith.mulf %64, %62 : vector<16x32xf32>
    %66 = vector.extract_strided_slice %14 {offsets = [0, 0], sizes = [16, 32], strides = [1, 1]} : vector<16x128xf32> to vector<16x32xf32>
    %67 = arith.mulf %57, %66 : vector<16x32xf32>
    %68 = arith.addf %65, %67 : vector<16x32xf32>
    %69 = tpu.concatenate %68, %19 in 1 : vector<16x32xf32>, vector<16x96xf32> -> vector<16x128xf32>
    %70 = arith.truncf %69 : vector<16x128xf32> to vector<16x128xbf16>
    %c0_42 = arith.constant 0 : index
    %c1 = arith.constant 1 : index
    %c0_43 = arith.constant 0 : index
    %c0_44 = arith.constant 0 : index
    %71 = vector.load %arg13[%c0_42, %c1, %c0_43, %c0_44] : memref<1x2x128x128xbf16, #tpu.memory_space<vmem>>, vector<1x1x128x128xbf16>
    %72 = vector.shape_cast %71 : vector<1x1x128x128xbf16> to vector<128x128xbf16>
    %cst_45 = arith.constant dense<0.000000e+00> : vector<16x128xf32>
    %73 = tpu.matmul %70, %72, %cst_45 {dimension_numbers = #tpu.dot_dimension_numbers<[1], [0], [0], [1], [0, 0, 1, 1], [], []>} : vector<16x128xbf16>, vector<128x128xbf16>, vector<16x128xf32> -> vector<16x128xf32>
    %74 = arith.truncf %73 : vector<16x128xf32> to vector<16x128xbf16>
    %cst_46 = arith.constant dense<0.000000e+00> : vector<40x128xf32>
    %75 = tpu.matmul %3, %74, %cst_46 {dimension_numbers = #tpu.dot_dimension_numbers<[1], [0], [0], [1], [0, 0, 1, 1], [], []>} : vector<40x16xbf16>, vector<16x128xbf16>, vector<40x128xf32> -> vector<40x128xf32>
    %76 = arith.addf %75, %18 : vector<40x128xf32>
    %cst_47 = arith.constant 0.000000e+00 : f32
    %77 = vector.broadcast %cst_47 : f32 to vector<40x128xf32>
    %78 = arith.maximumf %76, %77 : vector<40x128xf32>
    %79 = arith.truncf %78 : vector<40x128xf32> to vector<40x128xbf16>
    %cst_48 = arith.constant dense<0.000000e+00> : vector<16x128xf32>
    %80 = tpu.matmul %4, %79, %cst_48 {dimension_numbers = #tpu.dot_dimension_numbers<[1], [0], [0], [1], [0, 0, 1, 1], [], []>} : vector<16x40xbf16>, vector<40x128xbf16>, vector<16x128xf32> -> vector<16x128xf32>
    %81 = vector.broadcast %5 : vector<16x1xf32> to vector<16x128xf32>
    %82 = arith.mulf %80, %81 : vector<16x128xf32>
    %83 = arith.truncf %82 : vector<16x128xf32> to vector<16x128xbf16>
    %c0_49 = arith.constant 0 : index
    %c0_50 = arith.constant 0 : index
    %c0_51 = arith.constant 0 : index
    %84 = vector.load %arg14[%c0_49, %c0_50, %c0_51] : memref<1x128x128xbf16, #tpu.memory_space<vmem>>, vector<1x128x128xbf16>
    %85 = vector.shape_cast %84 : vector<1x128x128xbf16> to vector<128x128xbf16>
    %cst_52 = arith.constant dense<0.000000e+00> : vector<16x128xf32>
    %86 = tpu.matmul %83, %85, %cst_52 {dimension_numbers = #tpu.dot_dimension_numbers<[1], [0], [0], [1], [0, 0, 1, 1], [], []>} : vector<16x128xbf16>, vector<128x128xbf16>, vector<16x128xf32> -> vector<16x128xf32>
    %87 = arith.truncf %69 : vector<16x128xf32> to vector<16x128xbf16>
    %c0_53 = arith.constant 0 : index
    %c0_54 = arith.constant 0 : index
    %c0_55 = arith.constant 0 : index
    %88 = vector.load %arg15[%c0_53, %c0_54, %c0_55] : memref<1x128x128xbf16, #tpu.memory_space<vmem>>, vector<1x128x128xbf16>
    %89 = vector.shape_cast %88 : vector<1x128x128xbf16> to vector<128x128xbf16>
    %cst_56 = arith.constant dense<0.000000e+00> : vector<16x128xf32>
    %90 = tpu.matmul %87, %89, %cst_56 {dimension_numbers = #tpu.dot_dimension_numbers<[1], [0], [0], [1], [0, 0, 1, 1], [], []>} : vector<16x128xbf16>, vector<128x128xbf16>, vector<16x128xf32> -> vector<16x128xf32>
    %91 = arith.addf %86, %90 : vector<16x128xf32>
    %c0_57 = arith.constant 0 : index
    %c0_58 = arith.constant 0 : index
    %c0_59 = arith.constant 0 : index
    %92 = vector.load %arg16[%c0_57, %c0_58, %c0_59] : memref<1x1x128xf32, #tpu.memory_space<vmem>>, vector<1x1x128xf32>
    %93 = vector.shape_cast %92 : vector<1x1x128xf32> to vector<1x128xf32>
    %94 = vector.broadcast %93 : vector<1x128xf32> to vector<16x128xf32>
    %95 = arith.addf %91, %94 : vector<16x128xf32>
    %96 = vector.extract_strided_slice %95 {offsets = [0, 0], sizes = [16, 32], strides = [1, 1]} : vector<16x128xf32> to vector<16x32xf32>
    %97 = arith.negf %96 : vector<16x32xf32>
    %98 = math.exp %97 : vector<16x32xf32>
    %cst_60 = arith.constant 1.000000e+00 : f32
    %99 = vector.broadcast %cst_60 : f32 to vector<16x32xf32>
    %100 = arith.addf %99, %98 : vector<16x32xf32>
    %101 = arith.divf %99, %100 : vector<16x32xf32>
    %102 = vector.extract_strided_slice %95 {offsets = [0, 32], sizes = [16, 32], strides = [1, 1]} : vector<16x128xf32> to vector<16x32xf32>
    %103 = arith.negf %102 : vector<16x32xf32>
    %104 = math.exp %103 : vector<16x32xf32>
    %cst_61 = arith.constant 1.000000e+00 : f32
    %105 = vector.broadcast %cst_61 : f32 to vector<16x32xf32>
    %106 = arith.addf %105, %104 : vector<16x32xf32>
    %107 = arith.divf %105, %106 : vector<16x32xf32>
    %108 = vector.extract_strided_slice %95 {offsets = [0, 64], sizes = [16, 32], strides = [1, 1]} : vector<16x128xf32> to vector<16x32xf32>
    %109 = vector.extract_strided_slice %95 {offsets = [0, 96], sizes = [16, 32], strides = [1, 1]} : vector<16x128xf32> to vector<16x32xf32>
    %110 = arith.mulf %101, %109 : vector<16x32xf32>
    %111 = arith.addf %108, %110 : vector<16x32xf32>
    %112 = math.tanh %111 : vector<16x32xf32>
    %cst_62 = arith.constant 1.000000e+00 : f32
    %113 = vector.broadcast %cst_62 : f32 to vector<16x32xf32>
    %114 = arith.subf %113, %107 : vector<16x32xf32>
    %115 = arith.mulf %114, %112 : vector<16x32xf32>
    %116 = vector.extract_strided_slice %69 {offsets = [0, 0], sizes = [16, 32], strides = [1, 1]} : vector<16x128xf32> to vector<16x32xf32>
    %117 = arith.mulf %107, %116 : vector<16x32xf32>
    %118 = arith.addf %115, %117 : vector<16x32xf32>
    %119 = tpu.concatenate %118, %19 in 1 : vector<16x32xf32>, vector<16x96xf32> -> vector<16x128xf32>
    %cst_63 = arith.constant 0.000000e+00 : f32
    %120 = vector.broadcast %cst_63 : f32 to vector<16x128xf32>
    %121 = arith.maximumf %119, %120 : vector<16x128xf32>
    %cst_64 = arith.constant 5.000000e-01 : f32
    %122 = vector.broadcast %cst_64 : f32 to vector<16x128xf32>
    %123 = arith.mulf %122, %121 : vector<16x128xf32>
    %cst_65 = arith.constant 5.000000e-01 : f32
    %124 = vector.broadcast %cst_65 : f32 to vector<16x128xf32>
    %125 = arith.mulf %124, %14 : vector<16x128xf32>
    %126 = arith.addf %123, %125 : vector<16x128xf32>
    %c0_66 = arith.constant 0 : index
    %c0_67 = arith.constant 0 : index
    %127 = vector.load %arg22[%c0_66, %c0_67] : memref<16x128xf32, #tpu.memory_space<vmem>>, vector<16x128xf32>
    tpu.vector_store %arg22[%c0_66, %c0_67], %126 {strides = array<i32>} : memref<16x128xf32, #tpu.memory_space<vmem>>, vector<16x128xf32>,
    %c2_i32 = arith.constant 2 : i32
    %128 = arith.cmpi eq, %arg0, %c2_i32 : i32
    %129 = arith.extui %128 : i1 to i32
    %c0_i32_68 = arith.constant 0 : i32
    %130 = arith.cmpi ne, %129, %c0_i32_68 : i32
    scf.if %130 {
      %c0_69 = arith.constant 0 : index
      %c0_70 = arith.constant 0 : index
      %131 = vector.load %arg6[%c0_69, %c0_70] : memref<8x16xbf16, #tpu.memory_space<vmem>>, vector<8x16xbf16>
      %132 = arith.truncf %126 : vector<16x128xf32> to vector<16x128xbf16>
      %cst_71 = arith.constant dense<0.000000e+00> : vector<8x128xf32>
      %133 = tpu.matmul %131, %132, %cst_71 {dimension_numbers = #tpu.dot_dimension_numbers<[1], [0], [0], [1], [0, 0, 1, 1], [], []>} : vector<8x16xbf16>, vector<16x128xbf16>, vector<8x128xf32> -> vector<8x128xf32>
      %c0_72 = arith.constant 0 : index
      %c0_73 = arith.constant 0 : index
      %134 = vector.load %arg7[%c0_72, %c0_73] : memref<8x1xf32, #tpu.memory_space<vmem>>, vector<8x1xf32>
      %135 = vector.broadcast %134 : vector<8x1xf32> to vector<8x128xf32>
      %136 = arith.mulf %133, %135 : vector<8x128xf32>
      %137 = arith.truncf %136 : vector<8x128xf32> to vector<8x128xbf16>
      %c0_74 = arith.constant 0 : index
      %c0_75 = arith.constant 0 : index
      %138 = vector.load %arg17[%c0_74, %c0_75] : memref<128x128xbf16, #tpu.memory_space<vmem>>, vector<128x128xbf16>
      %cst_76 = arith.constant dense<0.000000e+00> : vector<8x128xf32>
      %139 = tpu.matmul %137, %138, %cst_76 {dimension_numbers = #tpu.dot_dimension_numbers<[1], [0], [0], [1], [0, 0, 1, 1], [], []>} : vector<8x128xbf16>, vector<128x128xbf16>, vector<8x128xf32> -> vector<8x128xf32>
      %c0_77 = arith.constant 0 : index
      %c0_78 = arith.constant 0 : index
      %140 = vector.load %arg18[%c0_77, %c0_78] : memref<1x128xf32, #tpu.memory_space<vmem>>, vector<1x128xf32>
      %141 = vector.broadcast %140 : vector<1x128xf32> to vector<8x128xf32>
      %142 = arith.addf %139, %141 : vector<8x128xf32>
      %cst_79 = arith.constant 5.000000e-01 : f32
      %143 = vector.broadcast %cst_79 : f32 to vector<8x128xf32>
      %144 = arith.mulf %143, %142 : vector<8x128xf32>
      %cst_80 = arith.constant 0.707106769 : f32
      %145 = vector.broadcast %cst_80 : f32 to vector<8x128xf32>
      %146 = arith.mulf %142, %145 : vector<8x128xf32>
      %147 = math.erf %146 : vector<8x128xf32>
      %cst_81 = arith.constant 1.000000e+00 : f32
      %148 = vector.broadcast %cst_81 : f32 to vector<8x128xf32>
      %149 = arith.addf %148, %147 : vector<8x128xf32>
      %150 = arith.mulf %144, %149 : vector<8x128xf32>
      %151 = arith.truncf %150 : vector<8x128xf32> to vector<8x128xbf16>
      %c0_82 = arith.constant 0 : index
      %c0_83 = arith.constant 0 : index
      %152 = vector.load %arg19[%c0_82, %c0_83] : memref<128x128xbf16, #tpu.memory_space<vmem>>, vector<128x128xbf16>
      %cst_84 = arith.constant dense<0.000000e+00> : vector<8x128xf32>
      %153 = tpu.matmul %151, %152, %cst_84 {dimension_numbers = #tpu.dot_dimension_numbers<[1], [0], [0], [1], [0, 0, 1, 1], [], []>} : vector<8x128xbf16>, vector<128x128xbf16>, vector<8x128xf32> -> vector<8x128xf32>
      %c0_85 = arith.constant 0 : index
      %c0_86 = arith.constant 0 : index
      %154 = vector.load %arg20[%c0_85, %c0_86] : memref<1x128xf32, #tpu.memory_space<vmem>>, vector<1x128xf32>
      %155 = vector.broadcast %154 : vector<1x128xf32> to vector<8x128xf32>
      %156 = arith.addf %153, %155 : vector<8x128xf32>
      %c0_87 = arith.constant 0 : index
      %c0_88 = arith.constant 0 : index
      %157 = vector.load %arg21[%c0_87, %c0_88] : memref<8x128xf32, #tpu.memory_space<vmem>>, vector<8x128xf32>
      tpu.vector_store %arg21[%c0_87, %c0_88], %156 {strides = array<i32>} : memref<8x128xf32, #tpu.memory_space<vmem>>, vector<8x128xf32>,
    } else {
    }
    return
  }
  func.func @transform_0(%arg0: i32) -> (i32, i32) {
    %c0_i32 = arith.constant 0 : i32
    %c0_i32_0 = arith.constant 0 : i32
    %c0_i32_1 = arith.constant 0 : i32
    return %c0_i32, %c0_i32_0 : i32, i32
  }
  func.func @transform_1(%arg0: i32) -> (i32, i32) {
    %c0_i32 = arith.constant 0 : i32
    %c0_i32_0 = arith.constant 0 : i32
    %c0_i32_1 = arith.constant 0 : i32
    return %c0_i32, %c0_i32_0 : i32, i32
  }
  func.func @transform_2(%arg0: i32) -> (i32, i32) {
    %c0_i32 = arith.constant 0 : i32
    %c0_i32_0 = arith.constant 0 : i32
    %c0_i32_1 = arith.constant 0 : i32
    return %c0_i32, %c0_i32_0 : i32, i32
  }
  func.func @transform_3(%arg0: i32) -> (i32, i32) {
    %c0_i32 = arith.constant 0 : i32
    %c0_i32_0 = arith.constant 0 : i32
    %c0_i32_1 = arith.constant 0 : i32
    return %c0_i32, %c0_i32_0 : i32, i32
  }
  func.func @transform_4(%arg0: i32) -> (i32, i32) {
    %c0_i32 = arith.constant 0 : i32
    %c0_i32_0 = arith.constant 0 : i32
    %c0_i32_1 = arith.constant 0 : i32
    return %c0_i32, %c0_i32_0 : i32, i32
  }
  func.func @transform_5(%arg0: i32) -> (i32, i32) {
    %c0_i32 = arith.constant 0 : i32
    %c0_i32_0 = arith.constant 0 : i32
    %c0_i32_1 = arith.constant 0 : i32
    return %c0_i32, %c0_i32_0 : i32, i32
  }
  func.func @transform_6(%arg0: i32) -> (i32, i32) {
    %c0_i32 = arith.constant 0 : i32
    %c0_i32_0 = arith.constant 0 : i32
    %c0_i32_1 = arith.constant 0 : i32
    return %c0_i32, %c0_i32_0 : i32, i32
  }
  func.func @transform_7(%arg0: i32) -> (i32, i32) {
    %c0_i32 = arith.constant 0 : i32
    %c0_i32_0 = arith.constant 0 : i32
    %c0_i32_1 = arith.constant 0 : i32
    return %c0_i32, %c0_i32_0 : i32, i32
  }
  func.func @transform_8(%arg0: i32) -> (i32, i32) {
    %c0_i32 = arith.constant 0 : i32
    %c0_i32_0 = arith.constant 0 : i32
    %c0_i32_1 = arith.constant 0 : i32
    return %c0_i32, %c0_i32_0 : i32, i32
  }
  func.func @transform_9(%arg0: i32) -> (i32, i32, i32) {
    %c0_i32 = arith.constant 0 : i32
    %c0_i32_0 = arith.constant 0 : i32
    %c0_i32_1 = arith.constant 0 : i32
    return %arg0, %c0_i32, %c0_i32_0 : i32, i32, i32
  }
  func.func @transform_10(%arg0: i32) -> (i32, i32, i32) {
    %c0_i32 = arith.constant 0 : i32
    %c0_i32_0 = arith.constant 0 : i32
    %c0_i32_1 = arith.constant 0 : i32
    return %arg0, %c0_i32, %c0_i32_0 : i32, i32, i32
  }
  func.func @transform_11(%arg0: i32) -> (i32, i32, i32) {
    %c0_i32 = arith.constant 0 : i32
    %c0_i32_0 = arith.constant 0 : i32
    %c0_i32_1 = arith.constant 0 : i32
    return %arg0, %c0_i32, %c0_i32_0 : i32, i32, i32
  }
  func.func @transform_12(%arg0: i32) -> (i32, i32, i32, i32) {
    %c0_i32 = arith.constant 0 : i32
    %c0_i32_0 = arith.constant 0 : i32
    %c0_i32_1 = arith.constant 0 : i32
    %c0_i32_2 = arith.constant 0 : i32
    return %arg0, %c0_i32, %c0_i32_0, %c0_i32_1 : i32, i32, i32, i32
  }
  func.func @transform_13(%arg0: i32) -> (i32, i32, i32) {
    %c0_i32 = arith.constant 0 : i32
    %c0_i32_0 = arith.constant 0 : i32
    %c0_i32_1 = arith.constant 0 : i32
    return %arg0, %c0_i32, %c0_i32_0 : i32, i32, i32
  }
  func.func @transform_14(%arg0: i32) -> (i32, i32, i32) {
    %c0_i32 = arith.constant 0 : i32
    %c0_i32_0 = arith.constant 0 : i32
    %c0_i32_1 = arith.constant 0 : i32
    return %arg0, %c0_i32, %c0_i32_0 : i32, i32, i32
  }
  func.func @transform_15(%arg0: i32) -> (i32, i32, i32) {
    %c0_i32 = arith.constant 0 : i32
    %c0_i32_0 = arith.constant 0 : i32
    %c0_i32_1 = arith.constant 0 : i32
    return %arg0, %c0_i32, %c0_i32_0 : i32, i32, i32
  }
  func.func @transform_16(%arg0: i32) -> (i32, i32) {
    %c0_i32 = arith.constant 0 : i32
    %c0_i32_0 = arith.constant 0 : i32
    %c0_i32_1 = arith.constant 0 : i32
    return %c0_i32, %c0_i32_0 : i32, i32
  }
  func.func @transform_17(%arg0: i32) -> (i32, i32) {
    %c0_i32 = arith.constant 0 : i32
    %c0_i32_0 = arith.constant 0 : i32
    %c0_i32_1 = arith.constant 0 : i32
    return %c0_i32, %c0_i32_0 : i32, i32
  }
  func.func @transform_18(%arg0: i32) -> (i32, i32) {
    %c0_i32 = arith.constant 0 : i32
    %c0_i32_0 = arith.constant 0 : i32
    %c0_i32_1 = arith.constant 0 : i32
    return %c0_i32, %c0_i32_0 : i32, i32
  }
  func.func @transform_19(%arg0: i32) -> (i32, i32) {
    %c0_i32 = arith.constant 0 : i32
    %c0_i32_0 = arith.constant 0 : i32
    %c0_i32_1 = arith.constant 0 : i32
    return %c0_i32, %c0_i32_0 : i32, i32
  }
  func.func @transform_20(%arg0: i32) -> (i32, i32) {
    %c0_i32 = arith.constant 0 : i32
    %c0_i32_0 = arith.constant 0 : i32
    %c0_i32_1 = arith.constant 0 : i32
    return %c0_i32, %c0_i32_0 : i32, i32
  }
}

</mosaic_0001>

<llo_original>
// kernel: gated_gcn_forward.1
$region0: #{gated_gcn_forward.1}
  #allocation0 [shape = 'u32[]', space=smem, size = 0x4, offset = 0x4, fixed_abs, tag = 'smem constant byte address 0x4 - core index']
  #allocation1 [shape = 'u32[72,128]{1,0:T(1,128)}', space=vmem, size = 0x9000, scoped, tag = 'internal scratch']
  #allocation2 [shape = 'f32[16,128]{1,0:T(8,128)}', space=vmem, size = 0x2000, scoped, tag = 'scratch operand']
  #allocation3 [shape = 'bf16[40,128]{1,0:T(8,128)(2,1)}', space=vmem, size = 0x2800, scoped, tag = 'scratch operand']
  %s0 = inlined_call_operand.vmem [shape: bf16[16,128], index: 0, kind: input, shape index: {}]
  %s1 = inlined_call_operand.vmem [shape: bf16[40,128], index: 1, kind: input, shape index: {}]
  %s2 = inlined_call_operand.vmem [shape: bf16[40,16], index: 2, kind: input, shape index: {}]
  %s3 = inlined_call_operand.vmem [shape: bf16[16,40], index: 3, kind: input, shape index: {}]
  %s4 = inlined_call_operand.vmem [shape: f32[16,1], index: 4, kind: input, shape index: {}]
  %s5 = inlined_call_operand.vmem [shape: bf16[8,16], index: 5, kind: input, shape index: {}]
  %s6 = inlined_call_operand.vmem [shape: f32[8,1], index: 6, kind: input, shape index: {}]
  %s7 = inlined_call_operand.vmem [shape: bf16[128,128], index: 7, kind: input, shape index: {}]
  %s8 = inlined_call_operand.vmem [shape: bf16[128,128], index: 8, kind: input, shape index: {}]
  %s9 = inlined_call_operand.hbm [shape: f32[3,1,128], index: 9, kind: input, shape index: {}]
  %s10 = inlined_call_operand.hbm [shape: f32[3,1,128], index: 10, kind: input, shape index: {}]
  %s11 = inlined_call_operand.hbm [shape: bf16[3,128,128], index: 11, kind: input, shape index: {}]
  %s12 = inlined_call_operand.hbm [shape: bf16[3,2,128,128], index: 12, kind: input, shape index: {}]
  %s13 = inlined_call_operand.hbm [shape: bf16[3,128,128], index: 13, kind: input, shape index: {}]
  %s14 = inlined_call_operand.hbm [shape: bf16[3,128,128], index: 14, kind: input, shape index: {}]
  %s15 = inlined_call_operand.hbm [shape: f32[3,1,128], index: 15, kind: input, shape index: {}]
  %s16 = inlined_call_operand.vmem [shape: bf16[128,128], index: 16, kind: input, shape index: {}]
  %s17 = inlined_call_operand.hbm [shape: f32[1,128], index: 17, kind: input, shape index: {}]
  %s18 = inlined_call_operand.hbm [shape: bf16[128,128], index: 18, kind: input, shape index: {}]
  %s19 = inlined_call_operand.hbm [shape: f32[1,128], index: 19, kind: input, shape index: {}]
  %s20 = inlined_call_operand.vmem [shape: f32[8,128], index: 20, kind: output, shape index: {}]
  %s21 = sld [smem:[#allocation0]]
  $region161: #{gated_gcn_forward.1} parent=0
    _
  %s23 = ssub.s32 1, %s21
  %s24 = scalar_select 0, %s23, %s21
  $region1: #{gated_gcn_forward.1} parent=0
    #allocation4 [shape = 'u8[1024]{0}', space=vmem, size = 0x400, scoped, tag = 'input window, operand 9']
    #allocation5 [shape = 's32[2]{0}', space=sflag, size = 0x8, scoped, tag = 'scoped memory for gated_gcn_forward.1']
    #allocation6 [shape = 'u8[1024]{0}', space=vmem, size = 0x400, scoped, tag = 'input window, operand 10']
    #allocation7 [shape = 's32[2]{0}', space=sflag, size = 0x8, scoped, tag = 'scoped memory for gated_gcn_forward.1']
    #allocation8 [shape = 'u8[65536]{0}', space=vmem, size = 0x10000, scoped, tag = 'input window, operand 11']
    #allocation9 [shape = 'u8[131072]{0}', space=vmem, size = 0x20000, scoped, tag = 'input window, operand 12']
    #allocation10 [shape = 's32[2]{0}', space=sflag, size = 0x8, scoped, tag = 'scoped memory for gated_gcn_forward.1']
    #allocation11 [shape = 'u8[65536]{0}', space=vmem, size = 0x10000, scoped, tag = 'input window, operand 13']
    #allocation12 [shape = 'u8[65536]{0}', space=vmem, size = 0x10000, scoped, tag = 'input window, operand 14']
    #allocation13 [shape = 's32[2]{0}', space=sflag, size = 0x8, scoped, tag = 'scoped memory for gated_gcn_forward.1']
    #allocation14 [shape = 'u8[1024]{0}', space=vmem, size = 0x400, scoped, tag = 'input window, operand 15']
    #allocation15 [shape = 'u8[512]{0}', space=vmem, size = 0x400, scoped, tag = 'input window, operand 17, single buffered']
    #allocation16 [shape = 's32[1]{0}', space=sflag, size = 0x4, scoped, tag = 'scoped memory for gated_gcn_forward.1']
    #allocation17 [shape = 'u8[32768]{0}', space=vmem, size = 0x8000, scoped, tag = 'input window, operand 18, single buffered']
    #allocation18 [shape = 'u8[512]{0}', space=vmem, size = 0x400, scoped, tag = 'input window, operand 19, single buffered']
    #allocation19 [shape = 's32[1]{0}', space=sflag, size = 0x4, scoped, tag = 'scoped memory for gated_gcn_forward.1']
    %25 = vsyncpa [#allocation5], 0
    %s26 = scalar_lea.sflag [#allocation5], 1
    %27 = vsyncpa %s26, 0
    %28 = vsyncpa [#allocation7], 0
    %s29 = scalar_lea.sflag [#allocation7], 1
    %30 = vsyncpa %s29, 0
    %31 = vsyncpa [#allocation10], 0
    %s32 = scalar_lea.sflag [#allocation10], 1
    %33 = vsyncpa %s32, 0
    %34 = vsyncpa [#allocation13], 0
    %s35 = scalar_lea.sflag [#allocation13], 1
    %36 = vsyncpa %s35, 0
    %37 = vsyncpa [#allocation16], 0
    %38 = vsyncpa [#allocation19], 0
    loop: start=0, step=1, limit=5
    $region2: #{gated_gcn_forward.1} parent=1 // loop_pre_header
      _
    $region3: #{gated_gcn_forward.1} parent=1 // loop_header
      %s40 = sphi 0, %s44
      %p41 = scmp.ge.s32.totalorder %s40, 5
      %s48 = sphi 0, %s48
      %s50 = sphi 0, %s48
      %s51 = sphi 0, %s50
      %s65 = sphi 0, %s51
      %s69 = sphi 0, %s69
      %s71 = sphi 0, %s69
      %s72 = sphi 0, %s71
      %s86 = sphi 0, %s72
      %s90 = sphi 0, %s90
      %s92 = sphi 0, %s90
      %s93 = sphi 0, %s92
      %s107 = sphi 0, %s93
      %s111 = sphi 0, %s111
      %s113 = sphi 0, %s111
      %s114 = sphi 0, %s113
      %s128 = sphi 0, %s114
      %s132 = sphi 0, %s132
      %s134 = sphi 0, %s132
      %s135 = sphi 0, %s134
      %s149 = sphi 0, %s135
      %s153 = sphi 0, %s153
      %s155 = sphi 0, %s153
      %s156 = sphi 0, %s155
      %s170 = sphi 0, %s156
      %s174 = sphi 0, %s174
      %s176 = sphi 0, %s174
      %s177 = sphi 0, %s176
      %s191 = sphi 0, %s177
      %s195 = sphi 0, %s195
      %s197 = sphi 0, %s195
      %s198 = sphi 0, %s197
      %s212 = sphi 0, %s198
      %s216 = sphi 0, %s216
      %s218 = sphi 0, %s216
      %s219 = sphi 0, %s218
      %s233 = sphi 0, %s219
      %s239 = sphi 0, %s241
      %s242 = sphi 0, %s239
      %s243 = sphi 0, %s242
      %s259 = sphi 0, %s243
      %s265 = sphi 0, %s267
      %s268 = sphi 0, %s265
      %s269 = sphi 0, %s268
      %s285 = sphi 0, %s269
      %s291 = sphi 0, %s293
      %s294 = sphi 0, %s291
      %s295 = sphi 0, %s294
      %s311 = sphi 0, %s295
      %s317 = sphi 0, %s319
      %s320 = sphi 0, %s317
      %s321 = sphi 0, %s320
      %s337 = sphi 0, %s321
      %s343 = sphi 0, %s345
      %s346 = sphi 0, %s343
      %s347 = sphi 0, %s346
      %s363 = sphi 0, %s347
      %s369 = sphi 0, %s371
      %s372 = sphi 0, %s369
      %s373 = sphi 0, %s372
      %s389 = sphi 0, %s373
      %s395 = sphi 0, %s397
      %s398 = sphi 0, %s395
      %s399 = sphi 0, %s398
      %s415 = sphi 0, %s399
      %s419 = sphi 0, %s419
      %s421 = sphi 0, %s419
      %s422 = sphi 0, %s421
      %s436 = sphi 0, %s422
      %s440 = sphi 0, %s440
      %s442 = sphi 0, %s440
      %s443 = sphi 0, %s442
      %s457 = sphi 0, %s443
      %s461 = sphi 0, %s461
      %s463 = sphi 0, %s461
      %s464 = sphi 0, %s463
      %s478 = sphi 0, %s464
      %s482 = sphi 0, %s482
      %s484 = sphi 0, %s482
      %s485 = sphi 0, %s484
      %s499 = sphi 0, %s485
      %s503 = sphi 0, %s503
      %s505 = sphi 0, %s503
      %s506 = sphi 0, %s505
      %s520 = sphi 0, %s506
    $region4: #{gated_gcn_forward.1} parent=1 // loop_header_branch
      %43 = sbr.rel (%p41) target = $region8
    $region5: #{gated_gcn_forward.1} parent=1 // loop_body
      %s45 = ssub.s32 %s40, 1
      %s46 = ssub.s32 %s40, 2
      %s47 = sadd.s32 %s40, 1
      %s49 = sadd.s32 %s48, 1
      %p52 = scmp.eq.s32.totalorder %s40, 2
      %p53 = scmp.ne.s32.totalorder %s48, %s50
      %p54 = scmp.eq.s32.totalorder %s40, 0
      %p55 = por %p53, %p54
      %p56 = scmp.ne.s32.totalorder %s48, %s50
      %p57 = scmp.eq.s32.totalorder %s45, 2
      %p58 = por %p56, %p57
      %p59 = scmp.ne.s32.totalorder %s50, %s51
      %p60 = scmp.eq.s32.totalorder %s45, 0
      %p61 = por %p59, %p60
      %p62 = scmp.ne.s32.totalorder %s50, %s51
      %p63 = scmp.eq.s32.totalorder %s46, 2
      %p64 = por %p62, %p63
      %p66 = scmp.ne.s32.totalorder %s51, %s65
      %p67 = scmp.eq.s32.totalorder %s46, 0
      %p68 = por %p66, %p67
      %s70 = sadd.s32 %s69, 1
      %p73 = scmp.eq.s32.totalorder %s40, 2
      %p74 = scmp.ne.s32.totalorder %s69, %s71
      %p75 = scmp.eq.s32.totalorder %s40, 0
      %p76 = por %p74, %p75
      %p77 = scmp.ne.s32.totalorder %s69, %s71
      %p78 = scmp.eq.s32.totalorder %s45, 2
      %p79 = por %p77, %p78
      %p80 = scmp.ne.s32.totalorder %s71, %s72
      %p81 = scmp.eq.s32.totalorder %s45, 0
      %p82 = por %p80, %p81
      %p83 = scmp.ne.s32.totalorder %s71, %s72
      %p84 = scmp.eq.s32.totalorder %s46, 2
      %p85 = por %p83, %p84
      %p87 = scmp.ne.s32.totalorder %s72, %s86
      %p88 = scmp.eq.s32.totalorder %s46, 0
      %p89 = por %p87, %p88
      %s91 = sadd.s32 %s90, 1
      %p94 = scmp.eq.s32.totalorder %s40, 2
      %p95 = scmp.ne.s32.totalorder %s90, %s92
      %p96 = scmp.eq.s32.totalorder %s40, 0
      %p97 = por %p95, %p96
      %p98 = scmp.ne.s32.totalorder %s90, %s92
      %p99 = scmp.eq.s32.totalorder %s45, 2
      %p100 = por %p98, %p99
      %p101 = scmp.ne.s32.totalorder %s92, %s93
      %p102 = scmp.eq.s32.totalorder %s45, 0
      %p103 = por %p101, %p102
      %p104 = scmp.ne.s32.totalorder %s92, %s93
      %p105 = scmp.eq.s32.totalorder %s46, 2
      %p106 = por %p104, %p105
      %p108 = scmp.ne.s32.totalorder %s93, %s107
      %p109 = scmp.eq.s32.totalorder %s46, 0
      %p110 = por %p108, %p109
      %s112 = sadd.s32 %s111, 1
      %p115 = scmp.eq.s32.totalorder %s40, 2
      %p116 = scmp.ne.s32.totalorder %s111, %s113
      %p117 = scmp.eq.s32.totalorder %s40, 0
      %p118 = por %p116, %p117
      %p119 = scmp.ne.s32.totalorder %s111, %s113
      %p120 = scmp.eq.s32.totalorder %s45, 2
      %p121 = por %p119, %p120
      %p122 = scmp.ne.s32.totalorder %s113, %s114
      %p123 = scmp.eq.s32.totalorder %s45, 0
      %p124 = por %p122, %p123
      %p125 = scmp.ne.s32.totalorder %s113, %s114
      %p126 = scmp.eq.s32.totalorder %s46, 2
      %p127 = por %p125, %p126
      %p129 = scmp.ne.s32.totalorder %s114, %s128
      %p130 = scmp.eq.s32.totalorder %s46, 0
      %p131 = por %p129, %p130
      %s133 = sadd.s32 %s132, 1
      %p136 = scmp.eq.s32.totalorder %s40, 2
      %p137 = scmp.ne.s32.totalorder %s132, %s134
      %p138 = scmp.eq.s32.totalorder %s40, 0
      %p139 = por %p137, %p138
      %p140 = scmp.ne.s32.totalorder %s132, %s134
      %p141 = scmp.eq.s32.totalorder %s45, 2
      %p142 = por %p140, %p141
      %p143 = scmp.ne.s32.totalorder %s134, %s135
      %p144 = scmp.eq.s32.totalorder %s45, 0
      %p145 = por %p143, %p144
      %p146 = scmp.ne.s32.totalorder %s134, %s135
      %p147 = scmp.eq.s32.totalorder %s46, 2
      %p148 = por %p146, %p147
      %p150 = scmp.ne.s32.totalorder %s135, %s149
      %p151 = scmp.eq.s32.totalorder %s46, 0
      %p152 = por %p150, %p151
      %s154 = sadd.s32 %s153, 1
      %p157 = scmp.eq.s32.totalorder %s40, 2
      %p158 = scmp.ne.s32.totalorder %s153, %s155
      %p159 = scmp.eq.s32.totalorder %s40, 0
      %p160 = por %p158, %p159
      %p161 = scmp.ne.s32.totalorder %s153, %s155
      %p162 = scmp.eq.s32.totalorder %s45, 2
      %p163 = por %p161, %p162
      %p164 = scmp.ne.s32.totalorder %s155, %s156
      %p165 = scmp.eq.s32.totalorder %s45, 0
      %p166 = por %p164, %p165
      %p167 = scmp.ne.s32.totalorder %s155, %s156
      %p168 = scmp.eq.s32.totalorder %s46, 2
      %p169 = por %p167, %p168
      %p171 = scmp.ne.s32.totalorder %s156, %s170
      %p172 = scmp.eq.s32.totalorder %s46, 0
      %p173 = por %p171, %p172
      %s175 = sadd.s32 %s174, 1
      %p178 = scmp.eq.s32.totalorder %s40, 2
      %p179 = scmp.ne.s32.totalorder %s174, %s176
      %p180 = scmp.eq.s32.totalorder %s40, 0
      %p181 = por %p179, %p180
      %p182 = scmp.ne.s32.totalorder %s174, %s176
      %p183 = scmp.eq.s32.totalorder %s45, 2
      %p184 = por %p182, %p183
      %p185 = scmp.ne.s32.totalorder %s176, %s177
      %p186 = scmp.eq.s32.totalorder %s45, 0
      %p187 = por %p185, %p186
      %p188 = scmp.ne.s32.totalorder %s176, %s177
      %p189 = scmp.eq.s32.totalorder %s46, 2
      %p190 = por %p188, %p189
      %p192 = scmp.ne.s32.totalorder %s177, %s191
      %p193 = scmp.eq.s32.totalorder %s46, 0
      %p194 = por %p192, %p193
      %s196 = sadd.s32 %s195, 1
      %p199 = scmp.eq.s32.totalorder %s40, 2
      %p200 = scmp.ne.s32.totalorder %s195, %s197
      %p201 = scmp.eq.s32.totalorder %s40, 0
      %p202 = por %p200, %p201
      %p203 = scmp.ne.s32.totalorder %s195, %s197
      %p204 = scmp.eq.s32.totalorder %s45, 2
      %p205 = por %p203, %p204
      %p206 = scmp.ne.s32.totalorder %s197, %s198
      %p207 = scmp.eq.s32.totalorder %s45, 0
      %p208 = por %p206, %p207
      %p209 = scmp.ne.s32.totalorder %s197, %s198
      %p210 = scmp.eq.s32.totalorder %s46, 2
      %p211 = por %p209, %p210
      %p213 = scmp.ne.s32.totalorder %s198, %s212
      %p214 = scmp.eq.s32.totalorder %s46, 0
      %p215 = por %p213, %p214
      %s217 = sadd.s32 %s216, 1
      %p220 = scmp.eq.s32.totalorder %s40, 2
      %p221 = scmp.ne.s32.totalorder %s216, %s218
      %p222 = scmp.eq.s32.totalorder %s40, 0
      %p223 = por %p221, %p222
      %p224 = scmp.ne.s32.totalorder %s216, %s218
      %p225 = scmp.eq.s32.totalorder %s45, 2
      %p226 = por %p224, %p225
      %p227 = scmp.ne.s32.totalorder %s218, %s219
      %p228 = scmp.eq.s32.totalorder %s45, 0
      %p229 = por %p227, %p228
      %p230 = scmp.ne.s32.totalorder %s218, %s219
      %p231 = scmp.eq.s32.totalorder %s46, 2
      %p232 = por %p230, %p231
      %p234 = scmp.ne.s32.totalorder %s219, %s233
      %p235 = scmp.eq.s32.totalorder %s46, 0
      %p236 = por %p234, %p235
      %s237 = ssub.s32 %s40, %s47
      %p238 = scmp.eq.s32.totalorder %s237, 0
      %s240 = sadd.s32 %s239, 1
      %s241 = scalar_select %p238, %s239, %s240
      %p244 = pneg %p238
      %p245 = scmp.eq.s32.totalorder %s40, 2
      %p246 = por %p244, %p245
      %p247 = scmp.ne.s32.totalorder %s239, %s242
      %p248 = scmp.eq.s32.totalorder %s40, 0
      %p249 = por %p247, %p248
      %p250 = scmp.ne.s32.totalorder %s239, %s242
      %p251 = scmp.eq.s32.totalorder %s45, 2
      %p252 = por %p250, %p251
      %p253 = scmp.ne.s32.totalorder %s242, %s243
      %p254 = scmp.eq.s32.totalorder %s45, 0
      %p255 = por %p253, %p254
      %p256 = scmp.ne.s32.totalorder %s242, %s243
      %p257 = scmp.eq.s32.totalorder %s46, 2
      %p258 = por %p256, %p257
      %p260 = scmp.ne.s32.totalorder %s243, %s259
      %p261 = scmp.eq.s32.totalorder %s46, 0
      %p262 = por %p260, %p261
      %s263 = ssub.s32 %s40, %s47
      %p264 = scmp.eq.s32.totalorder %s263, 0
      %s266 = sadd.s32 %s265, 1
      %s267 = scalar_select %p264, %s265, %s266
      %p270 = pneg %p264
      %p271 = scmp.eq.s32.totalorder %s40, 2
      %p272 = por %p270, %p271
      %p273 = scmp.ne.s32.totalorder %s265, %s268
      %p274 = scmp.eq.s32.totalorder %s40, 0
      %p275 = por %p273, %p274
      %p276 = scmp.ne.s32.totalorder %s265, %s268
      %p277 = scmp.eq.s32.totalorder %s45, 2
      %p278 = por %p276, %p277
      %p279 = scmp.ne.s32.totalorder %s268, %s269
      %p280 = scmp.eq.s32.totalorder %s45, 0
      %p281 = por %p279, %p280
      %p282 = scmp.ne.s32.totalorder %s268, %s269
      %p283 = scmp.eq.s32.totalorder %s46, 2
      %p284 = por %p282, %p283
      %p286 = scmp.ne.s32.totalorder %s269, %s285
      %p287 = scmp.eq.s32.totalorder %s46, 0
      %p288 = por %p286, %p287
      %s289 = ssub.s32 %s40, %s47
      %p290 = scmp.eq.s32.totalorder %s289, 0
      %s292 = sadd.s32 %s291, 1
      %s293 = scalar_select %p290, %s291, %s292
      %p296 = pneg %p290
      %p297 = scmp.eq.s32.totalorder %s40, 2
      %p298 = por %p296, %p297
      %p299 = scmp.ne.s32.totalorder %s291, %s294
      %p300 = scmp.eq.s32.totalorder %s40, 0
      %p301 = por %p299, %p300
      %p302 = scmp.ne.s32.totalorder %s291, %s294
      %p303 = scmp.eq.s32.totalorder %s45, 2
      %p304 = por %p302, %p303
      %p305 = scmp.ne.s32.totalorder %s294, %s295
      %p306 = scmp.eq.s32.totalorder %s45, 0
      %p307 = por %p305, %p306
      %p308 = scmp.ne.s32.totalorder %s294, %s295
      %p309 = scmp.eq.s32.totalorder %s46, 2
      %p310 = por %p308, %p309
      %p312 = scmp.ne.s32.totalorder %s295, %s311
      %p313 = scmp.eq.s32.totalorder %s46, 0
      %p314 = por %p312, %p313
      %s315 = ssub.s32 %s40, %s47
      %p316 = scmp.eq.s32.totalorder %s315, 0
      %s318 = sadd.s32 %s317, 1
      %s319 = scalar_select %p316, %s317, %s318
      %p322 = pneg %p316
      %p323 = scmp.eq.s32.totalorder %s40, 2
      %p324 = por %p322, %p323
      %p325 = scmp.ne.s32.totalorder %s317, %s320
      %p326 = scmp.eq.s32.totalorder %s40, 0
      %p327 = por %p325, %p326
      %p328 = scmp.ne.s32.totalorder %s317, %s320
      %p329 = scmp.eq.s32.totalorder %s45, 2
      %p330 = por %p328, %p329
      %p331 = scmp.ne.s32.totalorder %s320, %s321
      %p332 = scmp.eq.s32.totalorder %s45, 0
      %p333 = por %p331, %p332
      %p334 = scmp.ne.s32.totalorder %s320, %s321
      %p335 = scmp.eq.s32.totalorder %s46, 2
      %p336 = por %p334, %p335
      %p338 = scmp.ne.s32.totalorder %s321, %s337
      %p339 = scmp.eq.s32.totalorder %s46, 0
      %p340 = por %p338, %p339
      %s341 = ssub.s32 %s40, %s47
      %p342 = scmp.eq.s32.totalorder %s341, 0
      %s344 = sadd.s32 %s343, 1
      %s345 = scalar_select %p342, %s343, %s344
      %p348 = pneg %p342
      %p349 = scmp.eq.s32.totalorder %s40, 2
      %p350 = por %p348, %p349
      %p351 = scmp.ne.s32.totalorder %s343, %s346
      %p352 = scmp.eq.s32.totalorder %s40, 0
      %p353 = por %p351, %p352
      %p354 = scmp.ne.s32.totalorder %s343, %s346
      %p355 = scmp.eq.s32.totalorder %s45, 2
      %p356 = por %p354, %p355
      %p357 = scmp.ne.s32.totalorder %s346, %s347
      %p358 = scmp.eq.s32.totalorder %s45, 0
      %p359 = por %p357, %p358
      %p360 = scmp.ne.s32.totalorder %s346, %s347
      %p361 = scmp.eq.s32.totalorder %s46, 2
      %p362 = por %p360, %p361
      %p364 = scmp.ne.s32.totalorder %s347, %s363
      %p365 = scmp.eq.s32.totalorder %s46, 0
      %p366 = por %p364, %p365
      %s367 = ssub.s32 %s40, %s47
      %p368 = scmp.eq.s32.totalorder %s367, 0
      %s370 = sadd.s32 %s369, 1
      %s371 = scalar_select %p368, %s369, %s370
      %p374 = pneg %p368
      %p375 = scmp.eq.s32.totalorder %s40, 2
      %p376 = por %p374, %p375
      %p377 = scmp.ne.s32.totalorder %s369, %s372
      %p378 = scmp.eq.s32.totalorder %s40, 0
      %p379 = por %p377, %p378
      %p380 = scmp.ne.s32.totalorder %s369, %s372
      %p381 = scmp.eq.s32.totalorder %s45, 2
      %p382 = por %p380, %p381
      %p383 = scmp.ne.s32.totalorder %s372, %s373
      %p384 = scmp.eq.s32.totalorder %s45, 0
      %p385 = por %p383, %p384
      %p386 = scmp.ne.s32.totalorder %s372, %s373
      %p387 = scmp.eq.s32.totalorder %s46, 2
      %p388 = por %p386, %p387
      %p390 = scmp.ne.s32.totalorder %s373, %s389
      %p391 = scmp.eq.s32.totalorder %s46, 0
      %p392 = por %p390, %p391
      %s393 = ssub.s32 %s40, %s47
      %p394 = scmp.eq.s32.totalorder %s393, 0
      %s396 = sadd.s32 %s395, 1
      %s397 = scalar_select %p394, %s395, %s396
      %p400 = pneg %p394
      %p401 = scmp.eq.s32.totalorder %s40, 2
      %p402 = por %p400, %p401
      %p403 = scmp.ne.s32.totalorder %s395, %s398
      %p404 = scmp.eq.s32.totalorder %s40, 0
      %p405 = por %p403, %p404
      %p406 = scmp.ne.s32.totalorder %s395, %s398
      %p407 = scmp.eq.s32.totalorder %s45, 2
      %p408 = por %p406, %p407
      %p409 = scmp.ne.s32.totalorder %s398, %s399
      %p410 = scmp.eq.s32.totalorder %s45, 0
      %p411 = por %p409, %p410
      %p412 = scmp.ne.s32.totalorder %s398, %s399
      %p413 = scmp.eq.s32.totalorder %s46, 2
      %p414 = por %p412, %p413
      %p416 = scmp.ne.s32.totalorder %s399, %s415
      %p417 = scmp.eq.s32.totalorder %s46, 0
      %p418 = por %p416, %p417
      %s420 = sadd.s32 %s419, 1
      %p423 = scmp.eq.s32.totalorder %s40, 2
      %p424 = scmp.ne.s32.totalorder %s419, %s421
      %p425 = scmp.eq.s32.totalorder %s40, 0
      %p426 = por %p424, %p425
      %p427 = scmp.ne.s32.totalorder %s419, %s421
      %p428 = scmp.eq.s32.totalorder %s45, 2
      %p429 = por %p427, %p428
      %p430 = scmp.ne.s32.totalorder %s421, %s422
      %p431 = scmp.eq.s32.totalorder %s45, 0
      %p432 = por %p430, %p431
      %p433 = scmp.ne.s32.totalorder %s421, %s422
      %p434 = scmp.eq.s32.totalorder %s46, 2
      %p435 = por %p433, %p434
      %p437 = scmp.ne.s32.totalorder %s422, %s436
      %p438 = scmp.eq.s32.totalorder %s46, 0
      %p439 = por %p437, %p438
      %s441 = sadd.s32 %s440, 1
      %p444 = scmp.eq.s32.totalorder %s40, 2
      %p445 = scmp.ne.s32.totalorder %s440, %s442
      %p446 = scmp.eq.s32.totalorder %s40, 0
      %p447 = por %p445, %p446
      %p448 = scmp.ne.s32.totalorder %s440, %s442
      %p449 = scmp.eq.s32.totalorder %s45, 2
      %p450 = por %p448, %p449
      %p451 = scmp.ne.s32.totalorder %s442, %s443
      %p452 = scmp.eq.s32.totalorder %s45, 0
      %p453 = por %p451, %p452
      %p454 = scmp.ne.s32.totalorder %s442, %s443
      %p455 = scmp.eq.s32.totalorder %s46, 2
      %p456 = por %p454, %p455
      %p458 = scmp.ne.s32.totalorder %s443, %s457
      %p459 = scmp.eq.s32.totalorder %s46, 0
      %p460 = por %p458, %p459
      %s462 = sadd.s32 %s461, 1
      %p465 = scmp.eq.s32.totalorder %s40, 2
      %p466 = scmp.ne.s32.totalorder %s461, %s463
      %p467 = scmp.eq.s32.totalorder %s40, 0
      %p468 = por %p466, %p467
      %p469 = scmp.ne.s32.totalorder %s461, %s463
      %p470 = scmp.eq.s32.totalorder %s45, 2
      %p471 = por %p469, %p470
      %p472 = scmp.ne.s32.totalorder %s463, %s464
      %p473 = scmp.eq.s32.totalorder %s45, 0
      %p474 = por %p472, %p473
      %p475 = scmp.ne.s32.totalorder %s463, %s464
      %p476 = scmp.eq.s32.totalorder %s46, 2
      %p477 = por %p475, %p476
      %p479 = scmp.ne.s32.totalorder %s464, %s478
      %p480 = scmp.eq.s32.totalorder %s46, 0
      %p481 = por %p479, %p480
      %s483 = sadd.s32 %s482, 1
      %p486 = scmp.eq.s32.totalorder %s40, 2
      %p487 = scmp.ne.s32.totalorder %s482, %s484
      %p488 = scmp.eq.s32.totalorder %s40, 0
      %p489 = por %p487, %p488
      %p490 = scmp.ne.s32.totalorder %s482, %s484
      %p491 = scmp.eq.s32.totalorder %s45, 2
      %p492 = por %p490, %p491
      %p493 = scmp.ne.s32.totalorder %s484, %s485
      %p494 = scmp.eq.s32.totalorder %s45, 0
      %p495 = por %p493, %p494
      %p496 = scmp.ne.s32.totalorder %s484, %s485
      %p497 = scmp.eq.s32.totalorder %s46, 2
      %p498 = por %p496, %p497
      %p500 = scmp.ne.s32.totalorder %s485, %s499
      %p501 = scmp.eq.s32.totalorder %s46, 0
      %p502 = por %p500, %p501
      %s504 = sadd.s32 %s503, 1
      %p507 = scmp.eq.s32.totalorder %s40, 2
      %p508 = scmp.ne.s32.totalorder %s503, %s505
      %p509 = scmp.eq.s32.totalorder %s40, 0
      %p510 = por %p508, %p509
      %p511 = scmp.ne.s32.totalorder %s503, %s505
      %p512 = scmp.eq.s32.totalorder %s45, 2
      %p513 = por %p511, %p512
      %p514 = scmp.ne.s32.totalorder %s505, %s506
      %p515 = scmp.eq.s32.totalorder %s45, 0
      %p516 = por %p514, %p515
      %p517 = scmp.ne.s32.totalorder %s505, %s506
      %p518 = scmp.eq.s32.totalorder %s46, 2
      %p519 = por %p517, %p518
      %p521 = scmp.ne.s32.totalorder %s506, %s520
      %p522 = scmp.eq.s32.totalorder %s46, 0
      %p523 = por %p521, %p522
      %p524 = scmp.le.s32.totalorder 1, %s40
      %p525 = scmp.lt.s32.totalorder %s40, 4
      %p526 = pnand %p524, %p525
      %p527 = pneg %p526
      // Predicated region
      $region9: #{gated_gcn_forward.1} parent=5 // pred_check
        _
      $region10: #{gated_gcn_forward.1} parent=5 // pred_check_branch
        %529 = sbr.rel (%p526) target = $region12
      $region11: #{gated_gcn_forward.1} parent=5 // pred_region
        %s530 = ssub.s32 %s40, 1
        // Predicated region
        $region13: #{gated_gcn_forward.1} parent=11 // pred_check
          %p531 = pneg %p61
        $region14: #{gated_gcn_forward.1} parent=11 // pred_check_branch
          %533 = sbr.rel (%p531) target = $region16
        $region15: #{gated_gcn_forward.1} parent=11 // pred_region
          _
        $region16: #{gated_gcn_forward.1} parent=11 // pred_fallthru
          _
        // Predicated region
        $region17: #{gated_gcn_forward.1} parent=11 // pred_check
          %p534 = pneg %p82
        $region18: #{gated_gcn_forward.1} parent=11 // pred_check_branch
          %536 = sbr.rel (%p534) target = $region20
        $region19: #{gated_gcn_forward.1} parent=11 // pred_region
          _
        $region20: #{gated_gcn_forward.1} parent=11 // pred_fallthru
          _
        // Predicated region
        $region21: #{gated_gcn_forward.1} parent=11 // pred_check
          %p537 = pneg %p103
        $region22: #{gated_gcn_forward.1} parent=11 // pred_check_branch
          %539 = sbr.rel (%p537) target = $region24
        $region23: #{gated_gcn_forward.1} parent=11 // pred_region
          _
        $region24: #{gated_gcn_forward.1} parent=11 // pred_fallthru
          _
        // Predicated region
        $region25: #{gated_gcn_forward.1} parent=11 // pred_check
          %p540 = pneg %p124
        $region26: #{gated_gcn_forward.1} parent=11 // pred_check_branch
          %542 = sbr.rel (%p540) target = $region28
        $region27: #{gated_gcn_forward.1} parent=11 // pred_region
          _
        $region28: #{gated_gcn_forward.1} parent=11 // pred_fallthru
          _
        // Predicated region
        $region29: #{gated_gcn_forward.1} parent=11 // pred_check
          %p543 = pneg %p145
        $region30: #{gated_gcn_forward.1} parent=11 // pred_check_branch
          %545 = sbr.rel (%p543) target = $region32
        $region31: #{gated_gcn_forward.1} parent=11 // pred_region
          _
        $region32: #{gated_gcn_forward.1} parent=11 // pred_fallthru
          _
        // Predicated region
        $region33: #{gated_gcn_forward.1} parent=11 // pred_check
          %p546 = pneg %p166
        $region34: #{gated_gcn_forward.1} parent=11 // pred_check_branch
          %548 = sbr.rel (%p546) target = $region36
        $region35: #{gated_gcn_forward.1} parent=11 // pred_region
          _
        $region36: #{gated_gcn_forward.1} parent=11 // pred_fallthru
          _
        // Predicated region
        $region37: #{gated_gcn_forward.1} parent=11 // pred_check
          %p549 = pneg %p187
        $region38: #{gated_gcn_forward.1} parent=11 // pred_check_branch
          %551 = sbr.rel (%p549) target = $region40
        $region39: #{gated_gcn_forward.1} parent=11 // pred_region
          _
        $region40: #{gated_gcn_forward.1} parent=11 // pred_fallthru
          _
        // Predicated region
        $region41: #{gated_gcn_forward.1} parent=11 // pred_check
          %p552 = pneg %p208
        $region42: #{gated_gcn_forward.1} parent=11 // pred_check_branch
          %554 = sbr.rel (%p552) target = $region44
        $region43: #{gated_gcn_forward.1} parent=11 // pred_region
          _
        $region44: #{gated_gcn_forward.1} parent=11 // pred_fallthru
          _
        // Predicated region
        $region45: #{gated_gcn_forward.1} parent=11 // pred_check
          %p555 = pneg %p229
        $region46: #{gated_gcn_forward.1} parent=11 // pred_check_branch
          %557 = sbr.rel (%p555) target = $region48
        $region47: #{gated_gcn_forward.1} parent=11 // pred_region
          _
        $region48: #{gated_gcn_forward.1} parent=11 // pred_fallthru
          _
        // Predicated region
        $region49: #{gated_gcn_forward.1} parent=11 // pred_check
          %p558 = pneg %p432
        $region50: #{gated_gcn_forward.1} parent=11 // pred_check_branch
          %560 = sbr.rel (%p558) target = $region52
        $region51: #{gated_gcn_forward.1} parent=11 // pred_region
          _
        $region52: #{gated_gcn_forward.1} parent=11 // pred_fallthru
          _
        // Predicated region
        $region53: #{gated_gcn_forward.1} parent=11 // pred_check
          %p561 = pneg %p453
        $region54: #{gated_gcn_forward.1} parent=11 // pred_check_branch
          %563 = sbr.rel (%p561) target = $region56
        $region55: #{gated_gcn_forward.1} parent=11 // pred_region
          %565 = vsyncadd [#allocation16], 0
          %s567 = sshll.u32 %s17, 4
          %s568 = int_to_ptr.hbm [resolvable:$true] %s567
          %s569 = sshll.u32 [#allocation15], 4
          %s570 = int_to_ptr.vmem [resolvable:$true] %s569
          %572 = dma.hbm_to_vmem [thread:$0]  %s568, 16, %s570, [#allocation16]
        $region56: #{gated_gcn_forward.1} parent=11 // pred_fallthru
          _
        // Predicated region
        $region57: #{gated_gcn_forward.1} parent=11 // pred_check
          %p573 = pneg %p474
        $region58: #{gated_gcn_forward.1} parent=11 // pred_check_branch
          %575 = sbr.rel (%p573) target = $region60
        $region59: #{gated_gcn_forward.1} parent=11 // pred_region
          %577 = vsyncadd [#allocation16], 0
          %s578 = sshll.u32 %s18, 4
          %s579 = int_to_ptr.hbm [resolvable:$true] %s578
          %s580 = sshll.u32 [#allocation17], 4
          %s581 = int_to_ptr.vmem [resolvable:$true] %s580
          %586 = dma.hbm_to_vmem [thread:$0]  %s579, 1024, %s581, [#allocation16], 64, 64, 4
        $region60: #{gated_gcn_forward.1} parent=11 // pred_fallthru
          _
        // Predicated region
        $region61: #{gated_gcn_forward.1} parent=11 // pred_check
          %p587 = pneg %p495
        $region62: #{gated_gcn_forward.1} parent=11 // pred_check_branch
          %589 = sbr.rel (%p587) target = $region64
        $region63: #{gated_gcn_forward.1} parent=11 // pred_region
          %591 = vsyncadd [#allocation19], 0
          %s593 = sshll.u32 %s19, 4
          %s594 = int_to_ptr.hbm [resolvable:$true] %s593
          %s595 = sshll.u32 [#allocation18], 4
          %s596 = int_to_ptr.vmem [resolvable:$true] %s595
          %598 = dma.hbm_to_vmem [thread:$0]  %s594, 16, %s596, [#allocation19]
        $region64: #{gated_gcn_forward.1} parent=11 // pred_fallthru
          _
      $region12: #{gated_gcn_forward.1} parent=5 // pred_fallthru
        _
      %p599 = scmp.lt.s32.totalorder %s40, 3
      // Predicated region
      $region65: #{gated_gcn_forward.1} parent=5 // pred_check
        %p600 = pneg %p599
      $region66: #{gated_gcn_forward.1} parent=5 // pred_check_branch
        %602 = sbr.rel (%p600) target = $region68
      $region67: #{gated_gcn_forward.1} parent=5 // pred_region
        // Predicated region
        $region69: #{gated_gcn_forward.1} parent=67 // pred_check
          %p603 = pneg %p249
        $region70: #{gated_gcn_forward.1} parent=67 // pred_check_branch
          %605 = sbr.rel (%p603) target = $region72
        $region71: #{gated_gcn_forward.1} parent=67 // pred_region
          %s606 = sand.u32 %s239, 1
          %s607 = scalar_lea.sflag [#allocation5], %s606
          %s608 = sand.u32 %s239, 1
          %s609 = scalar_lea.vmem [#allocation4], %s608
          %611 = vsyncadd %s607, 0
          %s612 = scalar_lea.hbm %s9, %s40
          %s614 = sshll.u32 %s612, 4
          %s615 = int_to_ptr.hbm [resolvable:$true] %s614
          %s616 = sshll.u32 %s609, 4
          %s617 = int_to_ptr.vmem [resolvable:$true] %s616
          %619 = dma.hbm_to_vmem [thread:$0]  %s615, 16, %s617, %s607
        $region72: #{gated_gcn_forward.1} parent=67 // pred_fallthru
          _
        // Predicated region
        $region73: #{gated_gcn_forward.1} parent=67 // pred_check
          %p620 = pneg %p275
        $region74: #{gated_gcn_forward.1} parent=67 // pred_check_branch
          %622 = sbr.rel (%p620) target = $region76
        $region75: #{gated_gcn_forward.1} parent=67 // pred_region
          %s623 = sand.u32 %s40, 1
          %s624 = scalar_lea.sflag [#allocation7], %s623
          %s625 = sand.u32 %s265, 1
          %s626 = scalar_lea.vmem [#allocation6], %s625
          %628 = vsyncadd %s624, 0
          %s629 = scalar_lea.hbm %s10, %s40
          %s631 = sshll.u32 %s629, 4
          %s632 = int_to_ptr.hbm [resolvable:$true] %s631
          %s633 = sshll.u32 %s626, 4
          %s634 = int_to_ptr.vmem [resolvable:$true] %s633
          %636 = dma.hbm_to_vmem [thread:$0]  %s632, 16, %s634, %s624
        $region76: #{gated_gcn_forward.1} parent=67 // pred_fallthru
          _
        // Predicated region
        $region77: #{gated_gcn_forward.1} parent=67 // pred_check
          %p637 = pneg %p301
        $region78: #{gated_gcn_forward.1} parent=67 // pred_check_branch
          %639 = sbr.rel (%p637) target = $region80
        $region79: #{gated_gcn_forward.1} parent=67 // pred_region
          %s640 = sand.u32 %s40, 1
          %s641 = scalar_lea.sflag [#allocation7], %s640
          %s642 = sand.u32 %s291, 1
          %s643 = smul.addr %s642, 64
          %s644 = scalar_lea.vmem [#allocation8], %s643
          %646 = vsyncadd %s641, 0
          %s647 = smul.addr %s40, 16
          %s648 = smul.addr %s647, 4
          %s649 = scalar_lea.hbm %s11, %s648
          %s650 = sshll.u32 %s649, 4
          %s651 = int_to_ptr.hbm [resolvable:$true] %s650
          %s652 = sshll.u32 %s644, 4
          %s653 = int_to_ptr.vmem [resolvable:$true] %s652
          %658 = dma.hbm_to_vmem [thread:$0]  %s651, 1024, %s653, %s641, 64, 64, 4
        $region80: #{gated_gcn_forward.1} parent=67 // pred_fallthru
          _
        // Predicated region
        $region81: #{gated_gcn_forward.1} parent=67 // pred_check
          %p659 = pneg %p327
        $region82: #{gated_gcn_forward.1} parent=67 // pred_check_branch
          %661 = sbr.rel (%p659) target = $region84
        $region83: #{gated_gcn_forward.1} parent=67 // pred_region
          %s662 = sand.u32 %s40, 1
          %s663 = scalar_lea.sflag [#allocation10], %s662
          %s664 = sand.u32 %s317, 1
          %s665 = smul.addr %s664, 128
          %s666 = scalar_lea.vmem [#allocation9], %s665
          %668 = vsyncadd %s663, 0
          %s669 = smul.addr %s40, 32
          %s670 = smul.addr %s669, 4
          %s671 = scalar_lea.hbm %s12, %s670
          %s672 = sshll.u32 %s671, 4
          %s673 = int_to_ptr.hbm [resolvable:$true] %s672
          %s674 = sshll.u32 %s666, 4
          %s675 = int_to_ptr.vmem [resolvable:$true] %s674
          %680 = dma.hbm_to_vmem [thread:$0]  %s673, 2048, %s675, %s663, 64, 64, 4
        $region84: #{gated_gcn_forward.1} parent=67 // pred_fallthru
          _
        // Predicated region
        $region85: #{gated_gcn_forward.1} parent=67 // pred_check
          %p681 = pneg %p353
        $region86: #{gated_gcn_forward.1} parent=67 // pred_check_branch
          %683 = sbr.rel (%p681) target = $region88
        $region87: #{gated_gcn_forward.1} parent=67 // pred_region
          %s684 = sand.u32 %s40, 1
          %s685 = scalar_lea.sflag [#allocation10], %s684
          %s686 = sand.u32 %s343, 1
          %s687 = smul.addr %s686, 64
          %s688 = scalar_lea.vmem [#allocation11], %s687
          %690 = vsyncadd %s685, 0
          %s691 = smul.addr %s40, 16
          %s692 = smul.addr %s691, 4
          %s693 = scalar_lea.hbm %s13, %s692
          %s694 = sshll.u32 %s693, 4
          %s695 = int_to_ptr.hbm [resolvable:$true] %s694
          %s696 = sshll.u32 %s688, 4
          %s697 = int_to_ptr.vmem [resolvable:$true] %s696
          %702 = dma.hbm_to_vmem [thread:$0]  %s695, 1024, %s697, %s685, 64, 64, 4
        $region88: #{gated_gcn_forward.1} parent=67 // pred_fallthru
          _
        // Predicated region
        $region89: #{gated_gcn_forward.1} parent=67 // pred_check
          %p703 = pneg %p379
        $region90: #{gated_gcn_forward.1} parent=67 // pred_check_branch
          %705 = sbr.rel (%p703) target = $region92
        $region91: #{gated_gcn_forward.1} parent=67 // pred_region
          %s706 = sand.u32 %s40, 1
          %s707 = scalar_lea.sflag [#allocation13], %s706
          %s708 = sand.u32 %s369, 1
          %s709 = smul.addr %s708, 64
          %s710 = scalar_lea.vmem [#allocation12], %s709
          %712 = vsyncadd %s707, 0
          %s713 = smul.addr %s40, 16
          %s714 = smul.addr %s713, 4
          %s715 = scalar_lea.hbm %s14, %s714
          %s716 = sshll.u32 %s715, 4
          %s717 = int_to_ptr.hbm [resolvable:$true] %s716
          %s718 = sshll.u32 %s710, 4
          %s719 = int_to_ptr.vmem [resolvable:$true] %s718
          %724 = dma.hbm_to_vmem [thread:$0]  %s717, 1024, %s719, %s707, 64, 64, 4
        $region92: #{gated_gcn_forward.1} parent=67 // pred_fallthru
          _
        // Predicated region
        $region93: #{gated_gcn_forward.1} parent=67 // pred_check
          %p725 = pneg %p405
        $region94: #{gated_gcn_forward.1} parent=67 // pred_check_branch
          %727 = sbr.rel (%p725) target = $region96
        $region95: #{gated_gcn_forward.1} parent=67 // pred_region
          %s728 = sand.u32 %s40, 1
          %s729 = scalar_lea.sflag [#allocation13], %s728
          %s730 = sand.u32 %s395, 1
          %s731 = scalar_lea.vmem [#allocation14], %s730
          %733 = vsyncadd %s729, 0
          %s734 = scalar_lea.hbm %s15, %s40
          %s736 = sshll.u32 %s734, 4
          %s737 = int_to_ptr.hbm [resolvable:$true] %s736
          %s738 = sshll.u32 %s731, 4
          %s739 = int_to_ptr.vmem [resolvable:$true] %s738
          %741 = dma.hbm_to_vmem [thread:$0]  %s737, 16, %s739, %s729
        $region96: #{gated_gcn_forward.1} parent=67 // pred_fallthru
          _
      $region68: #{gated_gcn_forward.1} parent=5 // pred_fallthru
        _
      %p742 = scmp.le.s32.totalorder 1, %s40
      %p743 = scmp.lt.s32.totalorder %s40, 4
      %p744 = pnand %p742, %p743
      %p745 = pneg %p744
      // Predicated region
      $region97: #{gated_gcn_forward.1} parent=5 // pred_check
        _
      $region98: #{gated_gcn_forward.1} parent=5 // pred_check_branch
        %747 = sbr.rel (%p744) target = $region100
      $region99: #{gated_gcn_forward.1} parent=5 // pred_region
        %s748 = ssub.s32 %s40, 1
        %s749 = sand.u32 %s242, 1
        %s750 = scalar_lea.sflag [#allocation5], %s749
        %s751 = sand.u32 %s242, 1
        %s752 = scalar_lea.vmem [#allocation4], %s751
        // Predicated region
        $region101: #{gated_gcn_forward.1} parent=99 // pred_check
          %p753 = pneg %p255
        $region102: #{gated_gcn_forward.1} parent=99 // pred_check_branch
          %755 = sbr.rel (%p753) target = $region104
        $region103: #{gated_gcn_forward.1} parent=99 // pred_region
          %757 = dma.done %s750, 16
        $region104: #{gated_gcn_forward.1} parent=99 // pred_fallthru
          _
        %s758 = sand.u32 %s45, 1
        %s759 = scalar_lea.sflag [#allocation7], %s758
        %s760 = sand.u32 %s268, 1
        %s761 = scalar_lea.vmem [#allocation6], %s760
        // Predicated region
        $region105: #{gated_gcn_forward.1} parent=99 // pred_check
          %p762 = pneg %p281
        $region106: #{gated_gcn_forward.1} parent=99 // pred_check_branch
          %764 = sbr.rel (%p762) target = $region108
        $region107: #{gated_gcn_forward.1} parent=99 // pred_region
          %766 = dma.done %s759, 16
        $region108: #{gated_gcn_forward.1} parent=99 // pred_fallthru
          _
        %s767 = sand.u32 %s45, 1
        %s768 = scalar_lea.sflag [#allocation7], %s767
        %s769 = sand.u32 %s294, 1
        %s770 = smul.addr %s769, 64
        %s771 = scalar_lea.vmem [#allocation8], %s770
        // Predicated region
        $region109: #{gated_gcn_forward.1} parent=99 // pred_check
          %p772 = pneg %p307
        $region110: #{gated_gcn_forward.1} parent=99 // pred_check_branch
          %774 = sbr.rel (%p772) target = $region112
        $region111: #{gated_gcn_forward.1} parent=99 // pred_region
          %776 = dma.done %s768, 1024
        $region112: #{gated_gcn_forward.1} parent=99 // pred_fallthru
          _
        %s777 = sand.u32 %s45, 1
        %s778 = scalar_lea.sflag [#allocation10], %s777
        %s779 = sand.u32 %s320, 1
        %s780 = smul.addr %s779, 128
        %s781 = scalar_lea.vmem [#allocation9], %s780
        // Predicated region
        $region113: #{gated_gcn_forward.1} parent=99 // pred_check
          %p782 = pneg %p333
        $region114: #{gated_gcn_forward.1} parent=99 // pred_check_branch
          %784 = sbr.rel (%p782) target = $region116
        $region115: #{gated_gcn_forward.1} parent=99 // pred_region
          %786 = dma.done %s778, 2048
        $region116: #{gated_gcn_forward.1} parent=99 // pred_fallthru
          _
        %s787 = sand.u32 %s45, 1
        %s788 = scalar_lea.sflag [#allocation10], %s787
        %s789 = sand.u32 %s346, 1
        %s790 = smul.addr %s789, 64
        %s791 = scalar_lea.vmem [#allocation11], %s790
        // Predicated region
        $region117: #{gated_gcn_forward.1} parent=99 // pred_check
          %p792 = pneg %p359
        $region118: #{gated_gcn_forward.1} parent=99 // pred_check_branch
          %794 = sbr.rel (%p792) target = $region120
        $region119: #{gated_gcn_forward.1} parent=99 // pred_region
          %796 = dma.done %s788, 1024
        $region120: #{gated_gcn_forward.1} parent=99 // pred_fallthru
          _
        %s797 = sand.u32 %s45, 1
        %s798 = scalar_lea.sflag [#allocation13], %s797
        %s799 = sand.u32 %s372, 1
        %s800 = smul.addr %s799, 64
        %s801 = scalar_lea.vmem [#allocation12], %s800
        // Predicated region
        $region121: #{gated_gcn_forward.1} parent=99 // pred_check
          %p802 = pneg %p385
        $region122: #{gated_gcn_forward.1} parent=99 // pred_check_branch
          %804 = sbr.rel (%p802) target = $region124
        $region123: #{gated_gcn_forward.1} parent=99 // pred_region
          %806 = dma.done %s798, 1024
        $region124: #{gated_gcn_forward.1} parent=99 // pred_fallthru
          _
        %s807 = sand.u32 %s45, 1
        %s808 = scalar_lea.sflag [#allocation13], %s807
        %s809 = sand.u32 %s398, 1
        %s810 = scalar_lea.vmem [#allocation14], %s809
        // Predicated region
        $region125: #{gated_gcn_forward.1} parent=99 // pred_check
          %p811 = pneg %p411
        $region126: #{gated_gcn_forward.1} parent=99 // pred_check_branch
          %813 = sbr.rel (%p811) target = $region128
        $region127: #{gated_gcn_forward.1} parent=99 // pred_region
          %815 = dma.done %s808, 16
        $region128: #{gated_gcn_forward.1} parent=99 // pred_fallthru
          _
        // Predicated region
        $region129: #{gated_gcn_forward.1} parent=99 // pred_check
          %p816 = pneg %p453
        $region130: #{gated_gcn_forward.1} parent=99 // pred_check_branch
          %818 = sbr.rel (%p816) target = $region132
        $region131: #{gated_gcn_forward.1} parent=99 // pred_region
          %820 = dma.done [#allocation16], 16
        $region132: #{gated_gcn_forward.1} parent=99 // pred_fallthru
          _
        // Predicated region
        $region133: #{gated_gcn_forward.1} parent=99 // pred_check
          %p821 = pneg %p474
        $region134: #{gated_gcn_forward.1} parent=99 // pred_check_branch
          %823 = sbr.rel (%p821) target = $region136
        $region135: #{gated_gcn_forward.1} parent=99 // pred_region
          %825 = dma.done [#allocation16], 1024
        $region136: #{gated_gcn_forward.1} parent=99 // pred_fallthru
          _
        // Predicated region
        $region137: #{gated_gcn_forward.1} parent=99 // pred_check
          %p826 = pneg %p495
        $region138: #{gated_gcn_forward.1} parent=99 // pred_check_branch
          %828 = sbr.rel (%p826) target = $region140
        $region139: #{gated_gcn_forward.1} parent=99 // pred_region
          %830 = dma.done [#allocation19], 16
        $region140: #{gated_gcn_forward.1} parent=99 // pred_fallthru
          _
        %p831 = pneg %p61
        %p832 = pneg %p58
        %p833 = pneg %p82
        %p834 = pneg %p79
        %p835 = pneg %p103
        %p836 = pneg %p100
        %p837 = pneg %p124
        %p838 = pneg %p121
        %p839 = pneg %p145
        %p840 = pneg %p142
        %p841 = pneg %p166
        %p842 = pneg %p163
        %p843 = pneg %p187
        %p844 = pneg %p184
        %p845 = pneg %p208
        %p846 = pneg %p205
        %p847 = pneg %p229
        %p848 = pneg %p226
        %s849 = sand.u32 %s242, 1
        %s850 = scalar_lea.sflag [#allocation5], %s849
        %s851 = sand.u32 %s242, 1
        %s852 = scalar_lea.vmem [#allocation4], %s851
        %p853 = pneg %p255
        %p854 = pneg %p252
        %s855 = sand.u32 %s45, 1
        %s856 = scalar_lea.sflag [#allocation7], %s855
        %s857 = sand.u32 %s268, 1
        %s858 = scalar_lea.vmem [#allocation6], %s857
        %p859 = pneg %p281
        %p860 = pneg %p278
        %s861 = sand.u32 %s45, 1
        %s862 = scalar_lea.sflag [#allocation7], %s861
        %s863 = sand.u32 %s294, 1
        %s864 = smul.addr %s863, 64
        %s865 = scalar_lea.vmem [#allocation8], %s864
        %p866 = pneg %p307
        %p867 = pneg %p304
        %s868 = sand.u32 %s45, 1
        %s869 = scalar_lea.sflag [#allocation10], %s868
        %s870 = sand.u32 %s320, 1
        %s871 = smul.addr %s870, 128
        %s872 = scalar_lea.vmem [#allocation9], %s871
        %p873 = pneg %p333
        %p874 = pneg %p330
        %s875 = sand.u32 %s45, 1
        %s876 = scalar_lea.sflag [#allocation10], %s875
        %s877 = sand.u32 %s346, 1
        %s878 = smul.addr %s877, 64
        %s879 = scalar_lea.vmem [#allocation11], %s878
        %p880 = pneg %p359
        %p881 = pneg %p356
        %s882 = sand.u32 %s45, 1
        %s883 = scalar_lea.sflag [#allocation13], %s882
        %s884 = sand.u32 %s372, 1
        %s885 = smul.addr %s884, 64
        %s886 = scalar_lea.vmem [#allocation12], %s885
        %p887 = pneg %p385
        %p888 = pneg %p382
        %s889 = sand.u32 %s45, 1
        %s890 = scalar_lea.sflag [#allocation13], %s889
        %s891 = sand.u32 %s398, 1
        %s892 = scalar_lea.vmem [#allocation14], %s891
        %p893 = pneg %p411
        %p894 = pneg %p408
        %p895 = pneg %p432
        %p896 = pneg %p429
        %p897 = pneg %p453
        %p898 = pneg %p450
        %p899 = pneg %p474
        %p900 = pneg %p471
        %p901 = pneg %p495
        %p902 = pneg %p492
        %p903 = pneg %p516
        %p904 = pneg %p513
        %p906 = scmp.eq.s32.totalorder %s45, 0
        // Predicated region
        $region141: #{gated_gcn_forward.1} parent=99 // pred_check
          %p907 = pneg %p906
        $region142: #{gated_gcn_forward.1} parent=99 // pred_check_branch
          %909 = sbr.rel (%p907) target = $region144
        $region143: #{gated_gcn_forward.1} parent=99 // pred_region
          %v910 = vld [vmem:[%s0] sm:$0xf]
          %v911 = vld [vmem:[%s0 + $0x4] sm:$0xf]
          %v912 = vld [vmem:[%s7] sm:$0xf]
          %v913 = vld [vmem:[%s7 + $0x4] sm:$0xf]
          %v914 = vld [vmem:[%s7 + $0x8] sm:$0xf]
          %v915 = vld [vmem:[%s7 + $0xc] sm:$0xf]
          %v916 = vld [vmem:[%s7 + $0x10] sm:$0xf]
          %v917 = vld [vmem:[%s7 + $0x14] sm:$0xf]
          %v918 = vld [vmem:[%s7 + $0x18] sm:$0xf]
          %v919 = vld [vmem:[%s7 + $0x1c] sm:$0xf]
          %v920 = vld [vmem:[%s7 + $0x20] sm:$0xf]
          %v921 = vld [vmem:[%s7 + $0x24] sm:$0xf]
          %v922 = vld [vmem:[%s7 + $0x28] sm:$0xf]
          %v923 = vld [vmem:[%s7 + $0x2c] sm:$0xf]
          %v924 = vld [vmem:[%s7 + $0x30] sm:$0xf]
          %v925 = vld [vmem:[%s7 + $0x34] sm:$0xf]
          %v926 = vld [vmem:[%s7 + $0x38] sm:$0xf]
          %v927 = vld [vmem:[%s7 + $0x3c] sm:$0xf]
          %v930 = vunpack.c.l.b16 %v910
          %v931 = vunpack.c.l.b16 %v911
          %v932 = vpack.c.b16 %v931, %v930
          %v950 = vunpack.c.l.b16 %v912
          %v951 = vunpack.c.l.b16 %v913
          %v952 = vunpack.c.l.b16 %v914
          %v953 = vunpack.c.l.b16 %v915
          %v954 = vunpack.c.l.b16 %v916
          %v955 = vunpack.c.l.b16 %v917
          %v956 = vunpack.c.l.b16 %v918
          %v957 = vunpack.c.l.b16 %v919
          %v958 = vunpack.c.l.b16 %v920
          %v959 = vunpack.c.l.b16 %v921
          %v960 = vunpack.c.l.b16 %v922
          %v961 = vunpack.c.l.b16 %v923
          %v962 = vunpack.c.l.b16 %v924
          %v963 = vunpack.c.l.b16 %v925
          %v964 = vunpack.c.l.b16 %v926
          %v965 = vunpack.c.l.b16 %v927
          %v966 = vpack.c.b16 %v951, %v950
          %v967 = vpack.c.b16 %v953, %v952
          %v968 = vpack.c.b16 %v955, %v954
          %v969 = vpack.c.b16 %v957, %v956
          %v970 = vpack.c.b16 %v959, %v958
          %v971 = vpack.c.b16 %v961, %v960
          %v972 = vpack.c.b16 %v963, %v962
          %v973 = vpack.c.b16 %v965, %v964
          %982 = vmatpush.bf16.msra.mxu0 %v973
          %983 = vmatpush.bf16.msra.mxu0 %v972
          %984 = vmatpush.bf16.msra.mxu0 %v971
          %985 = vmatpush.bf16.msra.mxu0 %v970
          %986 = vmatpush.bf16.msra.mxu0 %v969
          %987 = vmatpush.bf16.msra.mxu0 %v968
          %988 = vmatpush.bf16.msra.mxu0 %v967
          %989 = vmatpush.bf16.msra.mxu0 %v966
          %990 = vmatmul.bf16.gmra.mxu0 %v932
          %v991 = vpop.f32.mrf.mxu0
          %v992 = vadd.f32 0.0, %v991
          %v993 = vpop.f32.mrf.mxu0
          %v994 = vadd.f32 0.0, %v993
          %995 = vdwg.mxu0
          %996 = vst [vmem:[#allocation2] sm:$0xff] %v992
          %997 = vst [vmem:[#allocation2 + $0x8] sm:$0xff] %v994
          %v998 = vld [vmem:[%s1] sm:$0xf]
          %v999 = vld [vmem:[%s1 + $0x4] sm:$0xf]
          %v1000 = vld [vmem:[%s1 + $0x8] sm:$0xf]
          %v1001 = vld [vmem:[%s1 + $0xc] sm:$0xf]
          %v1002 = vld [vmem:[%s1 + $0x10] sm:$0xf]
          %v1003 = vld [vmem:[%s8] sm:$0xf]
          %v1004 = vld [vmem:[%s8 + $0x4] sm:$0xf]
          %v1005 = vld [vmem:[%s8 + $0x8] sm:$0xf]
          %v1006 = vld [vmem:[%s8 + $0xc] sm:$0xf]
          %v1007 = vld [vmem:[%s8 + $0x10] sm:$0xf]
          %v1008 = vld [vmem:[%s8 + $0x14] sm:$0xf]
          %v1009 = vld [vmem:[%s8 + $0x18] sm:$0xf]
          %v1010 = vld [vmem:[%s8 + $0x1c] sm:$0xf]
          %v1011 = vld [vmem:[%s8 + $0x20] sm:$0xf]
          %v1012 = vld [vmem:[%s8 + $0x24] sm:$0xf]
          %v1013 = vld [vmem:[%s8 + $0x28] sm:$0xf]
          %v1014 = vld [vmem:[%s8 + $0x2c] sm:$0xf]
          %v1015 = vld [vmem:[%s8 + $0x30] sm:$0xf]
          %v1016 = vld [vmem:[%s8 + $0x34] sm:$0xf]
          %v1017 = vld [vmem:[%s8 + $0x38] sm:$0xf]
          %v1018 = vld [vmem:[%s8 + $0x3c] sm:$0xf]
          %v1024 = vunpack.c.l.b16 %v998
          %v1025 = vunpack.c.l.b16 %v999
          %v1026 = vunpack.c.l.b16 %v1000
          %v1027 = vunpack.c.l.b16 %v1001
          %v1028 = vunpack.c.l.b16 %v1002
          %v1029 = vpack.c.b16 %v1025, %v1024
          %v1030 = vpack.c.b16 %v1027, %v1026
          %v1031 = vpack.c.b16 %v1028, %v1028
          %v1051 = vunpack.c.l.b16 %v1003
          %v1052 = vunpack.c.l.b16 %v1004
          %v1053 = vunpack.c.l.b16 %v1005
          %v1054 = vunpack.c.l.b16 %v1006
          %v1055 = vunpack.c.l.b16 %v1007
          %v1056 = vunpack.c.l.b16 %v1008
          %v1057 = vunpack.c.l.b16 %v1009
          %v1058 = vunpack.c.l.b16 %v1010
          %v1059 = vunpack.c.l.b16 %v1011
          %v1060 = vunpack.c.l.b16 %v1012
          %v1061 = vunpack.c.l.b16 %v1013
          %v1062 = vunpack.c.l.b16 %v1014
          %v1063 = vunpack.c.l.b16 %v1015
          %v1064 = vunpack.c.l.b16 %v1016
          %v1065 = vunpack.c.l.b16 %v1017
          %v1066 = vunpack.c.l.b16 %v1018
          %v1067 = vpack.c.b16 %v1052, %v1051
          %v1068 = vpack.c.b16 %v1054, %v1053
          %v1069 = vpack.c.b16 %v1056, %v1055
          %v1070 = vpack.c.b16 %v1058, %v1057
          %v1071 = vpack.c.b16 %v1060, %v1059
          %v1072 = vpack.c.b16 %v1062, %v1061
          %v1073 = vpack.c.b16 %v1064, %v1063
          %v1074 = vpack.c.b16 %v1066, %v1065
          %1083 = vmatpush.bf16.msra.mxu0 %v1074
          %1084 = vmatpush.bf16.msra.mxu0 %v1073
          %1085 = vmatpush.bf16.msra.mxu0 %v1072
          %1086 = vmatpush.bf16.msra.mxu0 %v1071
          %1087 = vmatpush.bf16.msra.mxu0 %v1070
          %1088 = vmatpush.bf16.msra.mxu0 %v1069
          %1089 = vmatpush.bf16.msra.mxu0 %v1068
          %1090 = vmatpush.bf16.msra.mxu0 %v1067
          %1091 = vmatmul.bf16.gmra.mxu0 %v1029
          %v1092 = vpop.f32.mrf.mxu0
          %v1093 = vadd.f32 0.0, %v1092
          %v1094 = vpop.f32.mrf.mxu0
          %v1095 = vadd.f32 0.0, %v1094
          %1096 = vmatmul.bf16.gmra.mxu0 %v1030
          %v1097 = vpop.f32.mrf.mxu0
          %v1098 = vadd.f32 0.0, %v1097
          %v1099 = vpop.f32.mrf.mxu0
          %v1100 = vadd.f32 0.0, %v1099
          %1101 = vmatmul.bf16.gmra.mxu0 %v1031
          %v1102 = vpop.f32.mrf.mxu0
          %v1103 = vadd.f32 0.0, %v1102
          %v1104 = vpop.f32.mrf.mxu0
          %1105 = vdwg.mxu0
          %v1106 = vpack.c.bf16 %v1093, %v1093
          %v1107 = vpack.c.bf16 %v1095, %v1095
          %v1108 = vpack.c.bf16 %v1098, %v1098
          %v1109 = vpack.c.bf16 %v1100, %v1100
          %v1110 = vpack.c.bf16 %v1103, %v1103
          %1111 = vst [vmem:[#allocation3] sm:$0xf] %v1106
          %1112 = vst [vmem:[#allocation3 + $0x4] sm:$0xf] %v1107
          %1113 = vst [vmem:[#allocation3 + $0x8] sm:$0xf] %v1108
          %1114 = vst [vmem:[#allocation3 + $0xc] sm:$0xf] %v1109
          %1115 = vst [vmem:[#allocation3 + $0x10] sm:$0xf] %v1110
        $region144: #{gated_gcn_forward.1} parent=99 // pred_fallthru
          _
        %v1116 = vld [vmem:[%s2] sm:$0xf]
        %v1117 = vld [vmem:[%s2 + $0x4] sm:$0xf]
        %v1118 = vld [vmem:[%s2 + $0x8] sm:$0xf]
        %v1119 = vld [vmem:[%s2 + $0xc] sm:$0xf]
        %v1120 = vld [vmem:[%s2 + $0x10] sm:$0xf]
        %v1121 = vld [vmem:[%s3] sm:$0xf]
        %v1122 = vld [vmem:[%s3 + $0x4] sm:$0xf]
        %v1123 = vld [vmem:[%s4] sm:$0xff]
        %v1124 = vld [vmem:[%s4 + $0x8] sm:$0xff]
        %v1125 = vld [vmem:[#allocation2] sm:$0xff]
        %v1126 = vld [vmem:[#allocation2 + $0x8] sm:$0xff]
        %v1127 = vld [vmem:[%s752] sm:$0x1]
        %v1129 = vperm.slane %v1127, 0
        %v1131 = vmul.f32 %v1125, %v1129
        %v1132 = vmul.f32 %v1126, %v1129
        %v1133 = vld [vmem:[%s761] sm:$0x1]
        %v1135 = vperm.slane %v1133, 0
        %v1137 = vadd.f32 %v1131, %v1135
        %v1138 = vadd.f32 %v1132, %v1135
        %v1139 = vld [vmem:[#allocation3] sm:$0xf]
        %v1140 = vld [vmem:[#allocation3 + $0x4] sm:$0xf]
        %v1141 = vld [vmem:[#allocation3 + $0x8] sm:$0xf]
        %v1142 = vld [vmem:[#allocation3 + $0xc] sm:$0xf]
        %v1143 = vld [vmem:[#allocation3 + $0x10] sm:$0xf]
        %v1144 = vld [vmem:[%s771] sm:$0xf]
        %v1145 = vld [vmem:[%s771 + $0x4] sm:$0xf]
        %v1146 = vld [vmem:[%s771 + $0x8] sm:$0xf]
        %v1147 = vld [vmem:[%s771 + $0xc] sm:$0xf]
        %v1148 = vld [vmem:[%s771 + $0x10] sm:$0xf]
        %v1149 = vld [vmem:[%s771 + $0x14] sm:$0xf]
        %v1150 = vld [vmem:[%s771 + $0x18] sm:$0xf]
        %v1151 = vld [vmem:[%s771 + $0x1c] sm:$0xf]
        %v1152 = vld [vmem:[%s771 + $0x20] sm:$0xf]
        %v1153 = vld [vmem:[%s771 + $0x24] sm:$0xf]
        %v1154 = vld [vmem:[%s771 + $0x28] sm:$0xf]
        %v1155 = vld [vmem:[%s771 + $0x2c] sm:$0xf]
        %v1156 = vld [vmem:[%s771 + $0x30] sm:$0xf]
        %v1157 = vld [vmem:[%s771 + $0x34] sm:$0xf]
        %v1158 = vld [vmem:[%s771 + $0x38] sm:$0xf]
        %v1159 = vld [vmem:[%s771 + $0x3c] sm:$0xf]
        %v1165 = vunpack.c.l.b16 %v1139
        %v1166 = vunpack.c.l.b16 %v1140
        %v1167 = vunpack.c.l.b16 %v1141
        %v1168 = vunpack.c.l.b16 %v1142
        %v1169 = vunpack.c.l.b16 %v1143
        %v1170 = vpack.c.b16 %v1166, %v1165
        %v1171 = vpack.c.b16 %v1168, %v1167
        %v1172 = vpack.c.b16 %v1169, %v1169
        %v1192 = vunpack.c.l.b16 %v1144
        %v1193 = vunpack.c.l.b16 %v1145
        %v1194 = vunpack.c.l.b16 %v1146
        %v1195 = vunpack.c.l.b16 %v1147
        %v1196 = vunpack.c.l.b16 %v1148
        %v1197 = vunpack.c.l.b16 %v1149
        %v1198 = vunpack.c.l.b16 %v1150
        %v1199 = vunpack.c.l.b16 %v1151
        %v1200 = vunpack.c.l.b16 %v1152
        %v1201 = vunpack.c.l.b16 %v1153
        %v1202 = vunpack.c.l.b16 %v1154
        %v1203 = vunpack.c.l.b16 %v1155
        %v1204 = vunpack.c.l.b16 %v1156
        %v1205 = vunpack.c.l.b16 %v1157
        %v1206 = vunpack.c.l.b16 %v1158
        %v1207 = vunpack.c.l.b16 %v1159
        %v1208 = vpack.c.b16 %v1193, %v1192
        %v1209 = vpack.c.b16 %v1195, %v1194
        %v1210 = vpack.c.b16 %v1197, %v1196
        %v1211 = vpack.c.b16 %v1199, %v1198
        %v1212 = vpack.c.b16 %v1201, %v1200
        %v1213 = vpack.c.b16 %v1203, %v1202
        %v1214 = vpack.c.b16 %v1205, %v1204
        %v1215 = vpack.c.b16 %v1207, %v1206
        %1224 = vmatpush.bf16.msra.mxu0 %v1215
        %1225 = vmatpush.bf16.msra.mxu0 %v1214
        %1226 = vmatpush.bf16.msra.mxu0 %v1213
        %1227 = vmatpush.bf16.msra.mxu0 %v1212
        %1228 = vmatpush.bf16.msra.mxu0 %v1211
        %1229 = vmatpush.bf16.msra.mxu0 %v1210
        %1230 = vmatpush.bf16.msra.mxu0 %v1209
        %1231 = vmatpush.bf16.msra.mxu0 %v1208
        %1232 = vmatmul.bf16.gmra.mxu0 %v1170
        %v1233 = vpop.f32.mrf.mxu0
        %v1234 = vadd.f32 0.0, %v1233
        %v1235 = vpop.f32.mrf.mxu0
        %v1236 = vadd.f32 0.0, %v1235
        %1237 = vmatmul.bf16.gmra.mxu0 %v1171
        %v1238 = vpop.f32.mrf.mxu0
        %v1239 = vadd.f32 0.0, %v1238
        %v1240 = vpop.f32.mrf.mxu0
        %v1241 = vadd.f32 0.0, %v1240
        %1242 = vmatmul.bf16.gmra.mxu0 %v1172
        %v1243 = vpop.f32.mrf.mxu0
        %v1244 = vadd.f32 0.0, %v1243
        %v1245 = vpop.f32.mrf.mxu0
        %1246 = vdwg.mxu0
        %v1247 = vpack.c.bf16 %v1138, %v1137
        %v1248 = vld [vmem:[%s781] sm:$0xf]
        %v1249 = vld [vmem:[%s781 + $0x4] sm:$0xf]
        %v1250 = vld [vmem:[%s781 + $0x8] sm:$0xf]
        %v1251 = vld [vmem:[%s781 + $0xc] sm:$0xf]
        %v1252 = vld [vmem:[%s781 + $0x10] sm:$0xf]
        %v1253 = vld [vmem:[%s781 + $0x14] sm:$0xf]
        %v1254 = vld [vmem:[%s781 + $0x18] sm:$0xf]
        %v1255 = vld [vmem:[%s781 + $0x1c] sm:$0xf]
        %v1256 = vld [vmem:[%s781 + $0x20] sm:$0xf]
        %v1257 = vld [vmem:[%s781 + $0x24] sm:$0xf]
        %v1258 = vld [vmem:[%s781 + $0x28] sm:$0xf]
        %v1259 = vld [vmem:[%s781 + $0x2c] sm:$0xf]
        %v1260 = vld [vmem:[%s781 + $0x30] sm:$0xf]
        %v1261 = vld [vmem:[%s781 + $0x34] sm:$0xf]
        %v1262 = vld [vmem:[%s781 + $0x38] sm:$0xf]
        %v1263 = vld [vmem:[%s781 + $0x3c] sm:$0xf]
        %v1280 = vunpack.c.l.b16 %v1248
        %v1281 = vunpack.c.l.b16 %v1249
        %v1282 = vunpack.c.l.b16 %v1250
        %v1283 = vunpack.c.l.b16 %v1251
        %v1284 = vunpack.c.l.b16 %v1252
        %v1285 = vunpack.c.l.b16 %v1253
        %v1286 = vunpack.c.l.b16 %v1254
        %v1287 = vunpack.c.l.b16 %v1255
        %v1288 = vunpack.c.l.b16 %v1256
        %v1289 = vunpack.c.l.b16 %v1257
        %v1290 = vunpack.c.l.b16 %v1258
        %v1291 = vunpack.c.l.b16 %v1259
        %v1292 = vunpack.c.l.b16 %v1260
        %v1293 = vunpack.c.l.b16 %v1261
        %v1294 = vunpack.c.l.b16 %v1262
        %v1295 = vunpack.c.l.b16 %v1263
        %v1296 = vpack.c.b16 %v1281, %v1280
        %v1297 = vpack.c.b16 %v1283, %v1282
        %v1298 = vpack.c.b16 %v1285, %v1284
        %v1299 = vpack.c.b16 %v1287, %v1286
        %v1300 = vpack.c.b16 %v1289, %v1288
        %v1301 = vpack.c.b16 %v1291, %v1290
        %v1302 = vpack.c.b16 %v1293, %v1292
        %v1303 = vpack.c.b16 %v1295, %v1294
        %1312 = vmatpush.bf16.msra.mxu0 %v1303
        %1313 = vmatpush.bf16.msra.mxu0 %v1302
        %1314 = vmatpush.bf16.msra.mxu0 %v1301
        %1315 = vmatpush.bf16.msra.mxu0 %v1300
        %1316 = vmatpush.bf16.msra.mxu0 %v1299
        %1317 = vmatpush.bf16.msra.mxu0 %v1298
        %1318 = vmatpush.bf16.msra.mxu0 %v1297
        %1319 = vmatpush.bf16.msra.mxu0 %v1296
        %1320 = vmatmul.bf16.gmra.mxu0 %v1247
        %v1321 = vpop.f32.mrf.mxu0
        %v1322 = vadd.f32 0.0, %v1321
        %v1323 = vpop.f32.mrf.mxu0
        %v1324 = vadd.f32 0.0, %v1323
        %1325 = vdwg.mxu0
        %v1326 = vpack.c.bf16 %v1324, %v1322
        %v1332 = vunpack.c.l.b16 %v1116
        %v1333 = vunpack.c.l.b16 %v1117
        %v1334 = vunpack.c.l.b16 %v1118
        %v1335 = vunpack.c.l.b16 %v1119
        %v1336 = vunpack.c.l.b16 %v1120
        %v1337 = vpack.c.b16 %v1333, %v1332
        %v1338 = vpack.c.b16 %v1335, %v1334
        %v1339 = vpack.c.b16 %v1336, %v1336
        %vm1340 = vcmask 130048
        %v1342 = vsel %vm1340, %v1337, 0
        %v1345 = vsel %vm1340, %v1338, 0
        %v1348 = vsel %vm1340, %v1339, 0
        %1350 = vmatpush.bf16.msra.mxu0 0
        %1351 = vmatpush.bf16.msra.mxu0 0
        %1352 = vmatpush.bf16.msra.mxu0 0
        %1353 = vmatpush.bf16.msra.mxu0 0
        %1354 = vmatpush.bf16.msra.mxu0 0
        %1355 = vmatpush.bf16.msra.mxu0 0
        %1356 = vmatpush.bf16.msra.mxu0 0
        %1357 = vmatpush.bf16.msra.mxu0 %v1326
        %1358 = vmatmul.bf16.gmra.mxu0 %v1342
        %v1359 = vpop.f32.mrf.mxu0
        %v1360 = vadd.f32 %v1234, %v1359
        %v1361 = vpop.f32.mrf.mxu0
        %v1362 = vadd.f32 %v1236, %v1361
        %1363 = vmatmul.bf16.gmra.mxu0 %v1345
        %v1364 = vpop.f32.mrf.mxu0
        %v1365 = vadd.f32 %v1239, %v1364
        %v1366 = vpop.f32.mrf.mxu0
        %v1367 = vadd.f32 %v1241, %v1366
        %1368 = vmatmul.bf16.gmra.mxu0 %v1348
        %v1369 = vpop.f32.mrf.mxu0
        %v1370 = vadd.f32 %v1244, %v1369
        %v1371 = vpop.f32.mrf.mxu0
        %1372 = vdwg.mxu0
        %v1373 = vmax.f32 %v1360, 0.0
        %v1374 = vmax.f32 %v1362, 0.0
        %v1375 = vmax.f32 %v1365, 0.0
        %v1376 = vmax.f32 %v1367, 0.0
        %v1377 = vmax.f32 %v1370, 0.0
        %v1378 = vpack.c.bf16 %v1374, %v1373
        %v1379 = vpack.c.bf16 %v1376, %v1375
        %v1380 = vpack.c.bf16 %v1377, %v1377
        %v1383 = vunpack.c.l.b16 %v1121
        %v1384 = vunpack.c.l.b16 %v1122
        %v1385 = vpack.c.b16 %v1384, %v1383
        %vm1386 = vcmask 326656
        %v1388 = vsel %vm1386, %v1385, 0
        %vm1390 = vcmask 1043456
        %v1392 = vsel %vm1390, %v1380, 0
        %1394 = vmatpush.bf16.msra.mxu0 0
        %1395 = vmatpush.bf16.msra.mxu0 0
        %1396 = vmatpush.bf16.msra.mxu0 0
        %1397 = vmatpush.bf16.msra.mxu0 0
        %1398 = vmatpush.bf16.msra.mxu0 0
        %1399 = vmatpush.bf16.msra.mxu0 %v1392
        %1400 = vmatpush.bf16.msra.mxu0 %v1379
        %1401 = vmatpush.bf16.msra.mxu0 %v1378
        %1402 = vmatmul.bf16.gmra.mxu0 %v1388
        %v1403 = vpop.f32.mrf.mxu0
        %v1404 = vadd.f32 0.0, %v1403
        %v1405 = vpop.f32.mrf.mxu0
        %v1406 = vadd.f32 0.0, %v1405
        %1407 = vdwg.mxu0
        %1409 = vset.pattern.permute.xlu0 0
        %1410 = vperm.xlu0 %1409, %v1123
        %v1411 = vpop.permute.xlu0 %1410
        %1414 = vset.pattern.permute.xlu0 0
        %1415 = vperm.xlu0 %1414, %v1124
        %v1416 = vpop.permute.xlu0 %1415
        %v1418 = vmul.f32 %v1404, %v1411
        %v1419 = vmul.f32 %v1406, %v1416
        %v1420 = vpack.c.bf16 %v1419, %v1418
        %v1421 = vld [vmem:[%s791] sm:$0xf]
        %v1422 = vld [vmem:[%s791 + $0x4] sm:$0xf]
        %v1423 = vld [vmem:[%s791 + $0x8] sm:$0xf]
        %v1424 = vld [vmem:[%s791 + $0xc] sm:$0xf]
        %v1425 = vld [vmem:[%s791 + $0x10] sm:$0xf]
        %v1426 = vld [vmem:[%s791 + $0x14] sm:$0xf]
        %v1427 = vld [vmem:[%s791 + $0x18] sm:$0xf]
        %v1428 = vld [vmem:[%s791 + $0x1c] sm:$0xf]
        %v1429 = vld [vmem:[%s791 + $0x20] sm:$0xf]
        %v1430 = vld [vmem:[%s791 + $0x24] sm:$0xf]
        %v1431 = vld [vmem:[%s791 + $0x28] sm:$0xf]
        %v1432 = vld [vmem:[%s791 + $0x2c] sm:$0xf]
        %v1433 = vld [vmem:[%s791 + $0x30] sm:$0xf]
        %v1434 = vld [vmem:[%s791 + $0x34] sm:$0xf]
        %v1435 = vld [vmem:[%s791 + $0x38] sm:$0xf]
        %v1436 = vld [vmem:[%s791 + $0x3c] sm:$0xf]
        %v1437 = vld [vmem:[%s801] sm:$0xf]
        %v1438 = vld [vmem:[%s801 + $0x4] sm:$0xf]
        %v1439 = vld [vmem:[%s801 + $0x8] sm:$0xf]
        %v1440 = vld [vmem:[%s801 + $0xc] sm:$0xf]
        %v1441 = vld [vmem:[%s801 + $0x10] sm:$0xf]
        %v1442 = vld [vmem:[%s801 + $0x14] sm:$0xf]
        %v1443 = vld [vmem:[%s801 + $0x18] sm:$0xf]
        %v1444 = vld [vmem:[%s801 + $0x1c] sm:$0xf]
        %v1445 = vld [vmem:[%s801 + $0x20] sm:$0xf]
        %v1446 = vld [vmem:[%s801 + $0x24] sm:$0xf]
        %v1447 = vld [vmem:[%s801 + $0x28] sm:$0xf]
        %v1448 = vld [vmem:[%s801 + $0x2c] sm:$0xf]
        %v1449 = vld [vmem:[%s801 + $0x30] sm:$0xf]
        %v1450 = vld [vmem:[%s801 + $0x34] sm:$0xf]
        %v1451 = vld [vmem:[%s801 + $0x38] sm:$0xf]
        %v1452 = vld [vmem:[%s801 + $0x3c] sm:$0xf]
        %v1469 = vunpack.c.l.b16 %v1437
        %v1470 = vunpack.c.l.b16 %v1438
        %v1471 = vunpack.c.l.b16 %v1439
        %v1472 = vunpack.c.l.b16 %v1440
        %v1473 = vunpack.c.l.b16 %v1441
        %v1474 = vunpack.c.l.b16 %v1442
        %v1475 = vunpack.c.l.b16 %v1443
        %v1476 = vunpack.c.l.b16 %v1444
        %v1477 = vunpack.c.l.b16 %v1445
        %v1478 = vunpack.c.l.b16 %v1446
        %v1479 = vunpack.c.l.b16 %v1447
        %v1480 = vunpack.c.l.b16 %v1448
        %v1481 = vunpack.c.l.b16 %v1449
        %v1482 = vunpack.c.l.b16 %v1450
        %v1483 = vunpack.c.l.b16 %v1451
        %v1484 = vunpack.c.l.b16 %v1452
        %v1485 = vpack.c.b16 %v1470, %v1469
        %v1486 = vpack.c.b16 %v1472, %v1471
        %v1487 = vpack.c.b16 %v1474, %v1473
        %v1488 = vpack.c.b16 %v1476, %v1475
        %v1489 = vpack.c.b16 %v1478, %v1477
        %v1490 = vpack.c.b16 %v1480, %v1479
        %v1491 = vpack.c.b16 %v1482, %v1481
        %v1492 = vpack.c.b16 %v1484, %v1483
        %1501 = vmatpush.bf16.msra.mxu0 %v1492
        %1502 = vmatpush.bf16.msra.mxu0 %v1491
        %1503 = vmatpush.bf16.msra.mxu0 %v1490
        %1504 = vmatpush.bf16.msra.mxu0 %v1489
        %1505 = vmatpush.bf16.msra.mxu0 %v1488
        %1506 = vmatpush.bf16.msra.mxu0 %v1487
        %1507 = vmatpush.bf16.msra.mxu0 %v1486
        %1508 = vmatpush.bf16.msra.mxu0 %v1485
        %1509 = vmatmul.bf16.gmra.mxu0 %v1247
        %v1510 = vpop.f32.mrf.mxu0
        %v1511 = vadd.f32 0.0, %v1510
        %v1512 = vpop.f32.mrf.mxu0
        %v1513 = vadd.f32 0.0, %v1512
        %1514 = vdwg.mxu0
        %v1531 = vunpack.c.l.b16 %v1421
        %v1532 = vunpack.c.l.b16 %v1422
        %v1533 = vunpack.c.l.b16 %v1423
        %v1534 = vunpack.c.l.b16 %v1424
        %v1535 = vunpack.c.l.b16 %v1425
        %v1536 = vunpack.c.l.b16 %v1426
        %v1537 = vunpack.c.l.b16 %v1427
        %v1538 = vunpack.c.l.b16 %v1428
        %v1539 = vunpack.c.l.b16 %v1429
        %v1540 = vunpack.c.l.b16 %v1430
        %v1541 = vunpack.c.l.b16 %v1431
        %v1542 = vunpack.c.l.b16 %v1432
        %v1543 = vunpack.c.l.b16 %v1433
        %v1544 = vunpack.c.l.b16 %v1434
        %v1545 = vunpack.c.l.b16 %v1435
        %v1546 = vunpack.c.l.b16 %v1436
        %v1547 = vpack.c.b16 %v1532, %v1531
        %v1548 = vpack.c.b16 %v1534, %v1533
        %v1549 = vpack.c.b16 %v1536, %v1535
        %v1550 = vpack.c.b16 %v1538, %v1537
        %v1551 = vpack.c.b16 %v1540, %v1539
        %v1552 = vpack.c.b16 %v1542, %v1541
        %v1553 = vpack.c.b16 %v1544, %v1543
        %v1554 = vpack.c.b16 %v1546, %v1545
        %1563 = vmatpush.bf16.msra.mxu0 %v1554
        %1564 = vmatpush.bf16.msra.mxu0 %v1553
        %1565 = vmatpush.bf16.msra.mxu0 %v1552
        %1566 = vmatpush.bf16.msra.mxu0 %v1551
        %1567 = vmatpush.bf16.msra.mxu0 %v1550
        %1568 = vmatpush.bf16.msra.mxu0 %v1549
        %1569 = vmatpush.bf16.msra.mxu0 %v1548
        %1570 = vmatpush.bf16.msra.mxu0 %v1547
        %1571 = vmatmul.bf16.gmra.mxu0 %v1420
        %v1572 = vpop.f32.mrf.mxu0
        %v1573 = vadd.f32 %v1511, %v1572
        %v1574 = vpop.f32.mrf.mxu0
        %v1575 = vadd.f32 %v1513, %v1574
        %1576 = vdwg.mxu0
        %v1577 = vld [vmem:[%s810] sm:$0x1]
        %v1579 = vperm.slane %v1577, 0
        %v1581 = vadd.f32 %v1573, %v1579
        %v1582 = vadd.f32 %v1575, %v1579
        %v1583 = vxor.u32 %v1581, 2147483648
        %v1584 = vxor.u32 %v1582, 2147483648
        %v1585 = vmul.f32 %v1583, 1.442695
        %v1586 = vpow.pop %v1585
        %v1587 = vmul.f32 %v1584, 1.442695
        %v1588 = vpow.pop %v1587
        %v1589 = vadd.f32 %v1586, 1.0
        %v1590 = vadd.f32 %v1588, 1.0
        %v1591 = vrcp.pop %v1589
        %v1592 = vmul.f32 %v1589, %v1591
        %v1593 = vsub.f32 1.0, %v1592
        %v1594 = vmul.f32 %v1591, %v1593
        %v1595 = vadd.f32 %v1591, %v1594
        %vm1596 = vweird.f32 %v1589
        %vm1597 = vweird.f32 %v1591
        %vm1598 = vmor %vm1596, %vm1597
        %v1599 = vsel %vm1598, %v1591, %v1595
        %v1600 = vand.u32 2147483647, %v1589
        %vm1601 = vcmp.eq.f32.partialorder %v1600, 8.507059e+37
        %v1602 = vand.u32 %v1589, 2147483648
        %v1603 = vor.u32 1.1754944e-38, %v1602
        %v1604 = vsel %vm1601, %v1603, %v1599
        %v1605 = vmul.f32 1.0, %v1604
        %v1606 = vrcp.pop %v1590
        %v1607 = vmul.f32 %v1590, %v1606
        %v1608 = vsub.f32 1.0, %v1607
        %v1609 = vmul.f32 %v1606, %v1608
        %v1610 = vadd.f32 %v1606, %v1609
        %vm1611 = vweird.f32 %v1590
        %vm1612 = vweird.f32 %v1606
        %vm1613 = vmor %vm1611, %vm1612
        %v1614 = vsel %vm1613, %v1606, %v1610
        %v1615 = vand.u32 2147483647, %v1590
        %vm1616 = vcmp.eq.f32.partialorder %v1615, 8.507059e+37
        %v1617 = vand.u32 %v1590, 2147483648
        %v1618 = vor.u32 1.1754944e-38, %v1617
        %v1619 = vsel %vm1616, %v1618, %v1614
        %v1620 = vmul.f32 1.0, %v1619
        %1623 = vrot.lane.b32.xlu0 %v1581, 32
        %v1624 = vpop.permute.xlu0 %1623
        %1625 = vrot.lane.b32.xlu0 %v1582, 32
        %v1626 = vpop.permute.xlu0 %1625
        %v1629 = vmul.f32 %v1605, %v1624
        %v1630 = vmul.f32 %v1620, %v1626
        %1633 = vrot.lane.b32.xlu0 %v1629, 64
        %v1634 = vpop.permute.xlu0 %1633
        %1635 = vrot.lane.b32.xlu0 %v1630, 64
        %v1636 = vpop.permute.xlu0 %1635
        %v1639 = vadd.f32 %v1581, %v1634
        %v1640 = vadd.f32 %v1582, %v1636
        %v1641 = vtanh.pop %v1639
        %v1642 = vtanh.pop %v1640
        %v1643 = vsub.f32 1.0, %v1605
        %v1644 = vsub.f32 1.0, %v1620
        %1647 = vrot.lane.b32.xlu0 %v1641, 96
        %v1648 = vpop.permute.xlu0 %1647
        %1649 = vrot.lane.b32.xlu0 %v1642, 96
        %v1650 = vpop.permute.xlu0 %1649
        %v1653 = vmul.f32 %v1643, %v1648
        %v1654 = vmul.f32 %v1644, %v1650
        %1657 = vrot.lane.b32.xlu0 %v1137, 32
        %v1658 = vpop.permute.xlu0 %1657
        %1659 = vrot.lane.b32.xlu0 %v1138, 32
        %v1660 = vpop.permute.xlu0 %1659
        %v1663 = vmul.f32 %v1605, %v1658
        %v1664 = vmul.f32 %v1620, %v1660
        %v1665 = vadd.f32 %v1653, %v1663
        %v1666 = vadd.f32 %v1654, %v1664
        %1669 = vrot.lane.b32.xlu0 %v1665, 96
        %v1670 = vpop.permute.xlu0 %1669
        %1671 = vrot.lane.b32.xlu0 %v1666, 96
        %v1672 = vpop.permute.xlu0 %1671
        %vm1675 = vcmask 261120
        %v1676 = vsel %vm1675, %v1670, 0.0
        %v1677 = vsel %vm1675, %v1672, 0.0
        %v1678 = vpack.c.bf16 %v1677, %v1676
        %s1679 = scalar_lea.vmem %s781, 64 [#allocation9]
        %v1680 = vld [vmem:[%s1679] sm:$0xf]
        %v1681 = vld [vmem:[%s1679 + $0x4] sm:$0xf]
        %v1682 = vld [vmem:[%s1679 + $0x8] sm:$0xf]
        %v1683 = vld [vmem:[%s1679 + $0xc] sm:$0xf]
        %v1684 = vld [vmem:[%s1679 + $0x10] sm:$0xf]
        %v1685 = vld [vmem:[%s1679 + $0x14] sm:$0xf]
        %v1686 = vld [vmem:[%s1679 + $0x18] sm:$0xf]
        %v1687 = vld [vmem:[%s1679 + $0x1c] sm:$0xf]
        %v1688 = vld [vmem:[%s1679 + $0x20] sm:$0xf]
        %v1689 = vld [vmem:[%s1679 + $0x24] sm:$0xf]
        %v1690 = vld [vmem:[%s1679 + $0x28] sm:$0xf]
        %v1691 = vld [vmem:[%s1679 + $0x2c] sm:$0xf]
        %v1692 = vld [vmem:[%s1679 + $0x30] sm:$0xf]
        %v1693 = vld [vmem:[%s1679 + $0x34] sm:$0xf]
        %v1694 = vld [vmem:[%s1679 + $0x38] sm:$0xf]
        %v1695 = vld [vmem:[%s1679 + $0x3c] sm:$0xf]
        %v1712 = vunpack.c.l.b16 %v1680
        %v1713 = vunpack.c.l.b16 %v1681
        %v1714 = vunpack.c.l.b16 %v1682
        %v1715 = vunpack.c.l.b16 %v1683
        %v1716 = vunpack.c.l.b16 %v1684
        %v1717 = vunpack.c.l.b16 %v1685
        %v1718 = vunpack.c.l.b16 %v1686
        %v1719 = vunpack.c.l.b16 %v1687
        %v1720 = vunpack.c.l.b16 %v1688
        %v1721 = vunpack.c.l.b16 %v1689
        %v1722 = vunpack.c.l.b16 %v1690
        %v1723 = vunpack.c.l.b16 %v1691
        %v1724 = vunpack.c.l.b16 %v1692
        %v1725 = vunpack.c.l.b16 %v1693
        %v1726 = vunpack.c.l.b16 %v1694
        %v1727 = vunpack.c.l.b16 %v1695
        %v1728 = vpack.c.b16 %v1713, %v1712
        %v1729 = vpack.c.b16 %v1715, %v1714
        %v1730 = vpack.c.b16 %v1717, %v1716
        %v1731 = vpack.c.b16 %v1719, %v1718
        %v1732 = vpack.c.b16 %v1721, %v1720
        %v1733 = vpack.c.b16 %v1723, %v1722
        %v1734 = vpack.c.b16 %v1725, %v1724
        %v1735 = vpack.c.b16 %v1727, %v1726
        %1744 = vmatpush.bf16.msra.mxu0 %v1735
        %1745 = vmatpush.bf16.msra.mxu0 %v1734
        %1746 = vmatpush.bf16.msra.mxu0 %v1733
        %1747 = vmatpush.bf16.msra.mxu0 %v1732
        %1748 = vmatpush.bf16.msra.mxu0 %v1731
        %1749 = vmatpush.bf16.msra.mxu0 %v1730
        %1750 = vmatpush.bf16.msra.mxu0 %v1729
        %1751 = vmatpush.bf16.msra.mxu0 %v1728
        %1752 = vmatmul.bf16.gmra.mxu0 %v1678
        %v1753 = vpop.f32.mrf.mxu0
        %v1754 = vadd.f32 0.0, %v1753
        %v1755 = vpop.f32.mrf.mxu0
        %v1756 = vadd.f32 0.0, %v1755
        %1757 = vdwg.mxu0
        %v1758 = vpack.c.bf16 %v1756, %v1754
        %1759 = vmatpush.bf16.msra.mxu0 0
        %1760 = vmatpush.bf16.msra.mxu0 0
        %1761 = vmatpush.bf16.msra.mxu0 0
        %1762 = vmatpush.bf16.msra.mxu0 0
        %1763 = vmatpush.bf16.msra.mxu0 0
        %1764 = vmatpush.bf16.msra.mxu0 0
        %1765 = vmatpush.bf16.msra.mxu0 0
        %1766 = vmatpush.bf16.msra.mxu0 %v1758
        %1767 = vmatmul.bf16.gmra.mxu0 %v1342
        %v1768 = vpop.f32.mrf.mxu0
        %v1769 = vadd.f32 %v1234, %v1768
        %v1770 = vpop.f32.mrf.mxu0
        %v1771 = vadd.f32 %v1236, %v1770
        %1772 = vmatmul.bf16.gmra.mxu0 %v1345
        %v1773 = vpop.f32.mrf.mxu0
        %v1774 = vadd.f32 %v1239, %v1773
        %v1775 = vpop.f32.mrf.mxu0
        %v1776 = vadd.f32 %v1241, %v1775
        %1777 = vmatmul.bf16.gmra.mxu0 %v1348
        %v1778 = vpop.f32.mrf.mxu0
        %v1779 = vadd.f32 %v1244, %v1778
        %v1780 = vpop.f32.mrf.mxu0
        %1781 = vdwg.mxu0
        %v1782 = vmax.f32 %v1769, 0.0
        %v1783 = vmax.f32 %v1771, 0.0
        %v1784 = vmax.f32 %v1774, 0.0
        %v1785 = vmax.f32 %v1776, 0.0
        %v1786 = vmax.f32 %v1779, 0.0
        %v1787 = vpack.c.bf16 %v1783, %v1782
        %v1788 = vpack.c.bf16 %v1785, %v1784
        %v1789 = vpack.c.bf16 %v1786, %v1786
        %v1791 = vsel %vm1390, %v1789, 0
        %1793 = vmatpush.bf16.msra.mxu0 0
        %1794 = vmatpush.bf16.msra.mxu0 0
        %1795 = vmatpush.bf16.msra.mxu0 0
        %1796 = vmatpush.bf16.msra.mxu0 0
        %1797 = vmatpush.bf16.msra.mxu0 0
        %1798 = vmatpush.bf16.msra.mxu0 %v1791
        %1799 = vmatpush.bf16.msra.mxu0 %v1788
        %1800 = vmatpush.bf16.msra.mxu0 %v1787
        %1801 = vmatmul.bf16.gmra.mxu0 %v1388
        %v1802 = vpop.f32.mrf.mxu0
        %v1803 = vadd.f32 0.0, %v1802
        %v1804 = vpop.f32.mrf.mxu0
        %v1805 = vadd.f32 0.0, %v1804
        %1806 = vdwg.mxu0
        %v1807 = vmul.f32 %v1803, %v1411
        %v1808 = vmul.f32 %v1805, %v1416
        %v1809 = vpack.c.bf16 %v1808, %v1807
        %1810 = vmatpush.bf16.msra.mxu0 %v1492
        %1811 = vmatpush.bf16.msra.mxu0 %v1491
        %1812 = vmatpush.bf16.msra.mxu0 %v1490
        %1813 = vmatpush.bf16.msra.mxu0 %v1489
        %1814 = vmatpush.bf16.msra.mxu0 %v1488
        %1815 = vmatpush.bf16.msra.mxu0 %v1487
        %1816 = vmatpush.bf16.msra.mxu0 %v1486
        %1817 = vmatpush.bf16.msra.mxu0 %v1485
        %1818 = vmatmul.bf16.gmra.mxu0 %v1678
        %v1819 = vpop.f32.mrf.mxu0
        %v1820 = vadd.f32 0.0, %v1819
        %v1821 = vpop.f32.mrf.mxu0
        %v1822 = vadd.f32 0.0, %v1821
        %1823 = vdwg.mxu0
        %1824 = vmatpush.bf16.msra.mxu0 %v1554
        %1825 = vmatpush.bf16.msra.mxu0 %v1553
        %1826 = vmatpush.bf16.msra.mxu0 %v1552
        %1827 = vmatpush.bf16.msra.mxu0 %v1551
        %1828 = vmatpush.bf16.msra.mxu0 %v1550
        %1829 = vmatpush.bf16.msra.mxu0 %v1549
        %1830 = vmatpush.bf16.msra.mxu0 %v1548
        %1831 = vmatpush.bf16.msra.mxu0 %v1547
        %1832 = vmatmul.bf16.gmra.mxu0 %v1809
        %v1833 = vpop.f32.mrf.mxu0
        %v1834 = vadd.f32 %v1820, %v1833
        %v1835 = vpop.f32.mrf.mxu0
        %v1836 = vadd.f32 %v1822, %v1835
        %1837 = vdwg.mxu0
        %v1838 = vadd.f32 %v1834, %v1579
        %v1839 = vadd.f32 %v1836, %v1579
        %v1840 = vxor.u32 %v1838, 2147483648
        %v1841 = vxor.u32 %v1839, 2147483648
        %v1842 = vmul.f32 %v1840, 1.442695
        %v1843 = vpow.pop %v1842
        %v1844 = vmul.f32 %v1841, 1.442695
        %v1845 = vpow.pop %v1844
        %v1846 = vadd.f32 %v1843, 1.0
        %v1847 = vadd.f32 %v1845, 1.0
        %v1848 = vrcp.pop %v1846
        %v1849 = vmul.f32 %v1846, %v1848
        %v1850 = vsub.f32 1.0, %v1849
        %v1851 = vmul.f32 %v1848, %v1850
        %v1852 = vadd.f32 %v1848, %v1851
        %vm1853 = vweird.f32 %v1846
        %vm1854 = vweird.f32 %v1848
        %vm1855 = vmor %vm1853, %vm1854
        %v1856 = vsel %vm1855, %v1848, %v1852
        %v1857 = vand.u32 2147483647, %v1846
        %vm1858 = vcmp.eq.f32.partialorder %v1857, 8.507059e+37
        %v1859 = vand.u32 %v1846, 2147483648
        %v1860 = vor.u32 1.1754944e-38, %v1859
        %v1861 = vsel %vm1858, %v1860, %v1856
        %v1862 = vmul.f32 1.0, %v1861
        %v1863 = vrcp.pop %v1847
        %v1864 = vmul.f32 %v1847, %v1863
        %v1865 = vsub.f32 1.0, %v1864
        %v1866 = vmul.f32 %v1863, %v1865
        %v1867 = vadd.f32 %v1863, %v1866
        %vm1868 = vweird.f32 %v1847
        %vm1869 = vweird.f32 %v1863
        %vm1870 = vmor %vm1868, %vm1869
        %v1871 = vsel %vm1870, %v1863, %v1867
        %v1872 = vand.u32 2147483647, %v1847
        %vm1873 = vcmp.eq.f32.partialorder %v1872, 8.507059e+37
        %v1874 = vand.u32 %v1847, 2147483648
        %v1875 = vor.u32 1.1754944e-38, %v1874
        %v1876 = vsel %vm1873, %v1875, %v1871
        %v1877 = vmul.f32 1.0, %v1876
        %1880 = vrot.lane.b32.xlu0 %v1838, 32
        %v1881 = vpop.permute.xlu0 %1880
        %1882 = vrot.lane.b32.xlu0 %v1839, 32
        %v1883 = vpop.permute.xlu0 %1882
        %v1886 = vmul.f32 %v1862, %v1881
        %v1887 = vmul.f32 %v1877, %v1883
        %1890 = vrot.lane.b32.xlu0 %v1886, 64
        %v1891 = vpop.permute.xlu0 %1890
        %1892 = vrot.lane.b32.xlu0 %v1887, 64
        %v1893 = vpop.permute.xlu0 %1892
        %v1896 = vadd.f32 %v1838, %v1891
        %v1897 = vadd.f32 %v1839, %v1893
        %v1898 = vtanh.pop %v1896
        %v1899 = vtanh.pop %v1897
        %v1900 = vsub.f32 1.0, %v1862
        %v1901 = vsub.f32 1.0, %v1877
        %1904 = vrot.lane.b32.xlu0 %v1898, 96
        %v1905 = vpop.permute.xlu0 %1904
        %1906 = vrot.lane.b32.xlu0 %v1899, 96
        %v1907 = vpop.permute.xlu0 %1906
        %v1910 = vmul.f32 %v1900, %v1905
        %v1911 = vmul.f32 %v1901, %v1907
        %1914 = vrot.lane.b32.xlu0 %v1676, 32
        %v1915 = vpop.permute.xlu0 %1914
        %1916 = vrot.lane.b32.xlu0 %v1677, 32
        %v1917 = vpop.permute.xlu0 %1916
        %v1920 = vmul.f32 %v1862, %v1915
        %v1921 = vmul.f32 %v1877, %v1917
        %v1922 = vadd.f32 %v1910, %v1920
        %v1923 = vadd.f32 %v1911, %v1921
        %1926 = vrot.lane.b32.xlu0 %v1922, 96
        %v1927 = vpop.permute.xlu0 %1926
        %1928 = vrot.lane.b32.xlu0 %v1923, 96
        %v1929 = vpop.permute.xlu0 %1928
        %v1932 = vsel %vm1675, %v1927, 0.0
        %v1933 = vsel %vm1675, %v1929, 0.0
        %v1934 = vmax.f32 %v1932, 0.0
        %v1935 = vmax.f32 %v1933, 0.0
        %v1936 = vmul.f32 %v1934, 0.5
        %v1937 = vmul.f32 %v1935, 0.5
        %v1938 = vmul.f32 %v1137, 0.5
        %v1939 = vmul.f32 %v1138, 0.5
        %v1940 = vadd.f32 %v1936, %v1938
        %v1941 = vadd.f32 %v1937, %v1939
        %1942 = vst [vmem:[#allocation2] sm:$0xff] %v1940
        %1943 = vst [vmem:[#allocation2 + $0x8] sm:$0xff] %v1941
        %p1944 = scmp.eq.s32.totalorder %s45, 2
        // Predicated region
        $region145: #{gated_gcn_forward.1} parent=99 // pred_check
          %p1945 = pneg %p1944
        $region146: #{gated_gcn_forward.1} parent=99 // pred_check_branch
          %1947 = sbr.rel (%p1945) target = $region148
        $region147: #{gated_gcn_forward.1} parent=99 // pred_region
          %v1948 = vld [vmem:[%s5] sm:$0xf]
          %v1949 = vpack.c.bf16 %v1941, %v1940
          %v1951 = vsel %vm1340, %v1948, 0
          %1953 = vmatpush.bf16.msra.mxu0 0
          %1954 = vmatpush.bf16.msra.mxu0 0
          %1955 = vmatpush.bf16.msra.mxu0 0
          %1956 = vmatpush.bf16.msra.mxu0 0
          %1957 = vmatpush.bf16.msra.mxu0 0
          %1958 = vmatpush.bf16.msra.mxu0 0
          %1959 = vmatpush.bf16.msra.mxu0 0
          %1960 = vmatpush.bf16.msra.mxu0 %v1949
          %1961 = vmatmul.bf16.gmra.mxu0 %v1951
          %v1962 = vpop.f32.mrf.mxu0
          %v1963 = vadd.f32 0.0, %v1962
          %v1964 = vpop.f32.mrf.mxu0
          %1965 = vdwg.mxu0
          %v1966 = vld [vmem:[%s6] sm:$0xff]
          %1968 = vset.pattern.permute.xlu0 0
          %1969 = vperm.xlu0 %1968, %v1966
          %v1970 = vpop.permute.xlu0 %1969
          %v1972 = vmul.f32 %v1963, %v1970
          %v1973 = vpack.c.bf16 %v1972, %v1972
          %v1974 = vld [vmem:[%s16] sm:$0xf]
          %v1975 = vld [vmem:[%s16 + $0x4] sm:$0xf]
          %v1976 = vld [vmem:[%s16 + $0x8] sm:$0xf]
          %v1977 = vld [vmem:[%s16 + $0xc] sm:$0xf]
          %v1978 = vld [vmem:[%s16 + $0x10] sm:$0xf]
          %v1979 = vld [vmem:[%s16 + $0x14] sm:$0xf]
          %v1980 = vld [vmem:[%s16 + $0x18] sm:$0xf]
          %v1981 = vld [vmem:[%s16 + $0x1c] sm:$0xf]
          %v1982 = vld [vmem:[%s16 + $0x20] sm:$0xf]
          %v1983 = vld [vmem:[%s16 + $0x24] sm:$0xf]
          %v1984 = vld [vmem:[%s16 + $0x28] sm:$0xf]
          %v1985 = vld [vmem:[%s16 + $0x2c] sm:$0xf]
          %v1986 = vld [vmem:[%s16 + $0x30] sm:$0xf]
          %v1987 = vld [vmem:[%s16 + $0x34] sm:$0xf]
          %v1988 = vld [vmem:[%s16 + $0x38] sm:$0xf]
          %v1989 = vld [vmem:[%s16 + $0x3c] sm:$0xf]
          %v1990 = vld [vmem:[#allocation15] sm:$0x1]
          %v1992 = vperm.slane %v1990, 0
          %v2010 = vunpack.c.l.b16 %v1974
          %v2011 = vunpack.c.l.b16 %v1975
          %v2012 = vunpack.c.l.b16 %v1976
          %v2013 = vunpack.c.l.b16 %v1977
          %v2014 = vunpack.c.l.b16 %v1978
          %v2015 = vunpack.c.l.b16 %v1979
          %v2016 = vunpack.c.l.b16 %v1980
          %v2017 = vunpack.c.l.b16 %v1981
          %v2018 = vunpack.c.l.b16 %v1982
          %v2019 = vunpack.c.l.b16 %v1983
          %v2020 = vunpack.c.l.b16 %v1984
          %v2021 = vunpack.c.l.b16 %v1985
          %v2022 = vunpack.c.l.b16 %v1986
          %v2023 = vunpack.c.l.b16 %v1987
          %v2024 = vunpack.c.l.b16 %v1988
          %v2025 = vunpack.c.l.b16 %v1989
          %v2026 = vpack.c.b16 %v2011, %v2010
          %v2027 = vpack.c.b16 %v2013, %v2012
          %v2028 = vpack.c.b16 %v2015, %v2014
          %v2029 = vpack.c.b16 %v2017, %v2016
          %v2030 = vpack.c.b16 %v2019, %v2018
          %v2031 = vpack.c.b16 %v2021, %v2020
          %v2032 = vpack.c.b16 %v2023, %v2022
          %v2033 = vpack.c.b16 %v2025, %v2024
          %2042 = vmatpush.bf16.msra.mxu0 %v2033
          %2043 = vmatpush.bf16.msra.mxu0 %v2032
          %2044 = vmatpush.bf16.msra.mxu0 %v2031
          %2045 = vmatpush.bf16.msra.mxu0 %v2030
          %2046 = vmatpush.bf16.msra.mxu0 %v2029
          %2047 = vmatpush.bf16.msra.mxu0 %v2028
          %2048 = vmatpush.bf16.msra.mxu0 %v2027
          %2049 = vmatpush.bf16.msra.mxu0 %v2026
          %2050 = vmatmul.bf16.gmra.mxu0 %v1973
          %v2051 = vpop.f32.mrf.mxu0
          %v2052 = vadd.f32 %v1992, %v2051
          %v2053 = vpop.f32.mrf.mxu0
          %2054 = vdwg.mxu0
          %v2055 = vmul.f32 %v2052, 0.5
          %v2056 = vmul.f32 %v2052, 0.70710677
          %v2057 = vmul.f32 %v2056, %v2056
          %v2058 = vmin.f32 16.0, %v2057
          %v2059 = vmul.f32 %v2058, 2.1237322e-06
          %v2060 = vadd.f32 %v2059, 0.00028619796
          %v2061 = vmul.f32 %v2058, %v2060
          %v2062 = vadd.f32 %v2061, 0.0036580483
          %v2063 = vmul.f32 %v2058, %v2062
          %v2064 = vadd.f32 %v2063, 0.05243302
          %v2065 = vmul.f32 %v2058, %v2064
          %v2066 = vadd.f32 %v2065, 0.18741608
          %v2067 = vmul.f32 %v2058, %v2066
          %v2068 = vadd.f32 %v2067, 1.1283791
          %v2069 = vmul.f32 %v2056, %v2068
          %v2070 = vmul.f32 %v2058, 3.8918573e-05
          %v2071 = vadd.f32 %v2070, 0.001143296
          %v2072 = vmul.f32 %v2058, %v2071
          %v2073 = vadd.f32 %v2072, 0.014752088
          %v2074 = vmul.f32 %v2058, %v2073
          %v2075 = vadd.f32 %v2074, 0.112945676
          %v2076 = vmul.f32 %v2058, %v2075
          %v2077 = vadd.f32 %v2076, 0.4994258
          %v2078 = vmul.f32 %v2058, %v2077
          %v2079 = vadd.f32 %v2078, 1.0
          %v2080 = vrcp.pop %v2079
          %v2081 = vmul.f32 %v2079, %v2080
          %v2082 = vsub.f32 1.0, %v2081
          %v2083 = vmul.f32 %v2080, %v2082
          %v2084 = vadd.f32 %v2080, %v2083
          %vm2085 = vweird.f32 %v2079
          %vm2086 = vweird.f32 %v2080
          %vm2087 = vmor %vm2085, %vm2086
          %v2088 = vsel %vm2087, %v2080, %v2084
          %v2089 = vand.u32 2147483647, %v2079
          %vm2090 = vcmp.eq.f32.partialorder %v2089, 8.507059e+37
          %v2091 = vand.u32 %v2079, 2147483648
          %v2092 = vor.u32 1.1754944e-38, %v2091
          %v2093 = vsel %vm2090, %v2092, %v2088
          %v2094 = vmul.f32 %v2069, %v2093
          %v2095 = vmin.f32 %v2094, 1.0
          %v2096 = vmax.f32 %v2095, -1.0
          %v2097 = vadd.f32 %v2096, 1.0
          %v2098 = vmul.f32 %v2055, %v2097
          %v2099 = vpack.c.bf16 %v2098, %v2098
          %v2100 = vld [vmem:[#allocation17] sm:$0xf]
          %v2101 = vld [vmem:[#allocation17 + $0x4] sm:$0xf]
          %v2102 = vld [vmem:[#allocation17 + $0x8] sm:$0xf]
          %v2103 = vld [vmem:[#allocation17 + $0xc] sm:$0xf]
          %v2104 = vld [vmem:[#allocation17 + $0x10] sm:$0xf]
          %v2105 = vld [vmem:[#allocation17 + $0x14] sm:$0xf]
          %v2106 = vld [vmem:[#allocation17 + $0x18] sm:$0xf]
          %v2107 = vld [vmem:[#allocation17 + $0x1c] sm:$0xf]
          %v2108 = vld [vmem:[#allocation17 + $0x20] sm:$0xf]
          %v2109 = vld [vmem:[#allocation17 + $0x24] sm:$0xf]
          %v2110 = vld [vmem:[#allocation17 + $0x28] sm:$0xf]
          %v2111 = vld [vmem:[#allocation17 + $0x2c] sm:$0xf]
          %v2112 = vld [vmem:[#allocation17 + $0x30] sm:$0xf]
          %v2113 = vld [vmem:[#allocation17 + $0x34] sm:$0xf]
          %v2114 = vld [vmem:[#allocation17 + $0x38] sm:$0xf]
          %v2115 = vld [vmem:[#allocation17 + $0x3c] sm:$0xf]
          %v2116 = vld [vmem:[#allocation18] sm:$0x1]
          %v2118 = vperm.slane %v2116, 0
          %v2136 = vunpack.c.l.b16 %v2100
          %v2137 = vunpack.c.l.b16 %v2101
          %v2138 = vunpack.c.l.b16 %v2102
          %v2139 = vunpack.c.l.b16 %v2103
          %v2140 = vunpack.c.l.b16 %v2104
          %v2141 = vunpack.c.l.b16 %v2105
          %v2142 = vunpack.c.l.b16 %v2106
          %v2143 = vunpack.c.l.b16 %v2107
          %v2144 = vunpack.c.l.b16 %v2108
          %v2145 = vunpack.c.l.b16 %v2109
          %v2146 = vunpack.c.l.b16 %v2110
          %v2147 = vunpack.c.l.b16 %v2111
          %v2148 = vunpack.c.l.b16 %v2112
          %v2149 = vunpack.c.l.b16 %v2113
          %v2150 = vunpack.c.l.b16 %v2114
          %v2151 = vunpack.c.l.b16 %v2115
          %v2152 = vpack.c.b16 %v2137, %v2136
          %v2153 = vpack.c.b16 %v2139, %v2138
          %v2154 = vpack.c.b16 %v2141, %v2140
          %v2155 = vpack.c.b16 %v2143, %v2142
          %v2156 = vpack.c.b16 %v2145, %v2144
          %v2157 = vpack.c.b16 %v2147, %v2146
          %v2158 = vpack.c.b16 %v2149, %v2148
          %v2159 = vpack.c.b16 %v2151, %v2150
          %2168 = vmatpush.bf16.msra.mxu0 %v2159
          %2169 = vmatpush.bf16.msra.mxu0 %v2158
          %2170 = vmatpush.bf16.msra.mxu0 %v2157
          %2171 = vmatpush.bf16.msra.mxu0 %v2156
          %2172 = vmatpush.bf16.msra.mxu0 %v2155
          %2173 = vmatpush.bf16.msra.mxu0 %v2154
          %2174 = vmatpush.bf16.msra.mxu0 %v2153
          %2175 = vmatpush.bf16.msra.mxu0 %v2152
          %2176 = vmatmul.bf16.gmra.mxu0 %v2099
          %v2177 = vpop.f32.mrf.mxu0
          %v2178 = vadd.f32 %v2118, %v2177
          %v2179 = vpop.f32.mrf.mxu0
          %2180 = vdwg.mxu0
          %2181 = vst [vmem:[%s20] sm:$0xff] %v2178
        $region148: #{gated_gcn_forward.1} parent=99 // pred_fallthru
          _
        // Predicated region
        $region149: #{gated_gcn_forward.1} parent=99 // pred_check
          %p2182 = pneg %p513
        $region150: #{gated_gcn_forward.1} parent=99 // pred_check_branch
          %2184 = sbr.rel (%p2182) target = $region152
        $region151: #{gated_gcn_forward.1} parent=99 // pred_region
          _
        $region152: #{gated_gcn_forward.1} parent=99 // pred_fallthru
          _
        // Predicated region
        $region153: #{gated_gcn_forward.1} parent=99 // pred_check
          %p2185 = pneg %p513
        $region154: #{gated_gcn_forward.1} parent=99 // pred_check_branch
          %2187 = sbr.rel (%p2185) target = $region156
        $region155: #{gated_gcn_forward.1} parent=99 // pred_region
          _
        $region156: #{gated_gcn_forward.1} parent=99 // pred_fallthru
          _
      $region100: #{gated_gcn_forward.1} parent=5 // pred_fallthru
        _
      %p2188 = scmp.le.s32.totalorder 2, %s40
      // Predicated region
      $region157: #{gated_gcn_forward.1} parent=5 // pred_check
        %p2189 = pneg %p2188
      $region158: #{gated_gcn_forward.1} parent=5 // pred_check_branch
        %2191 = sbr.rel (%p2189) target = $region160
      $region159: #{gated_gcn_forward.1} parent=5 // pred_region
        %s2192 = ssub.s32 %s40, 2
      $region160: #{gated_gcn_forward.1} parent=5 // pred_fallthru
        _
    $region6: #{gated_gcn_forward.1} parent=1 // loop_footer
      %s44 = sadd.s32 1, %s40
    $region7: #{gated_gcn_forward.1} parent=1 // loop_footer_branch
      %39 = sbr.rel target = $region3
    $region8: #{gated_gcn_forward.1} parent=1 // loop_exit
      _
    %2193 = vsyncpa [#allocation5], 1
    %s2194 = scalar_lea.sflag [#allocation5], 1
    %2195 = vsyncpa %s2194, 1
    %2196 = vsyncpa [#allocation7], 1
    %s2197 = scalar_lea.sflag [#allocation7], 1
    %2198 = vsyncpa %s2197, 1
    %2199 = vsyncpa [#allocation10], 1
    %s2200 = scalar_lea.sflag [#allocation10], 1
    %2201 = vsyncpa %s2200, 1
    %2202 = vsyncpa [#allocation13], 1
    %s2203 = scalar_lea.sflag [#allocation13], 1
    %2204 = vsyncpa %s2203, 1
    %2205 = vsyncpa [#allocation16], 1
    %2206 = vsyncpa [#allocation19], 1

</llo_original>
